<compile_context>
chip_gen: v5e
topology: v5e:2x2
jax: 0.10.0
libtpu: 0.0.40
codegen_flags: <defaults>
</compile_context>

<pallas_src>
import functools

import jax
import jax.numpy as jnp
from jax import lax
from jax.experimental import pallas as pl
from jax.experimental.pallas import tpu as pltpu


def _sepconv_kernel(x_ref, dw_ref, pw_ref, o_ref, *, k, out_h, out_w):
    """One batch element: fused depthwise (k x k) + pointwise (1x1) conv."""
    x = x_ref[0].astype(jnp.float32)       # (Hp, Wp, C)   padded input slab
    dw = dw_ref[...].astype(jnp.float32)   # (k, k, C)     depthwise taps
    pw = pw_ref[...].astype(jnp.float32)   # (C, Cout)     pointwise weights

    c = x.shape[-1]
    acc = jnp.zeros((out_h, out_w, c), jnp.float32)
    # k is small and static -> fully unrolled shift-and-multiply tap loop.
    for i in range(k):
        for j in range(k):
            acc = acc + x[i:i + out_h, j:j + out_w, :] * dw[i:i + 1, j:j + 1, :]

    # Pointwise 1x1 conv == matmul over the channel (lane) axis on the MXU.
    out = jnp.dot(acc.reshape(out_h * out_w, c), pw,
                  preferred_element_type=jnp.float32)
    o_ref[0] = out.reshape(out_h, out_w, -1).astype(o_ref.dtype)


def separable_conv2d(x, dw_weight, pw_weight, *, padding=0):
    """Pallas implementation of SeparableConv2d.forward.

    Args:
      x:         (B, C, H, W)      NCHW, as in PyTorch.
      dw_weight: (C, 1, k, k)      depthwise Conv2d weight (groups=C, no bias).
      pw_weight: (Cout, C, 1, 1)   pointwise Conv2d weight (no bias).
      padding:   symmetric spatial padding of the depthwise conv.
    Returns:
      (B, Cout, Ho, Wo) with Ho = H + 2p - k + 1, Wo = W + 2p - k + 1.
    """
    b, c, h, w = x.shape
    k = dw_weight.shape[-1]
    c_out = pw_weight.shape[0]
    out_h = h + 2 * padding - k + 1
    out_w = w + 2 * padding - k + 1
    hp, wp = h + 2 * padding, w + 2 * padding

    # NCHW -> NHWC (+ spatial zero-pad) so channels sit on the lane axis.
    x_nhwc = jnp.transpose(x, (0, 2, 3, 1))
    x_pad = jnp.pad(
        x_nhwc, ((0, 0), (padding, padding), (padding, padding), (0, 0)))
    dw = jnp.transpose(dw_weight[:, 0, :, :], (1, 2, 0))   # (k, k, C)
    pw = jnp.transpose(pw_weight[:, :, 0, 0], (1, 0))      # (C, Cout)

    kernel = functools.partial(_sepconv_kernel, k=k, out_h=out_h, out_w=out_w)

    out_nhwc = pl.pallas_call(
        kernel,
        out_shape=jax.ShapeDtypeStruct((b, out_h, out_w, c_out), x.dtype),
        grid_spec=pltpu.PrefetchScalarGridSpec(
            num_scalar_prefetch=0,
            grid=(b,),
            in_specs=[
                pl.BlockSpec((1, hp, wp, c), lambda bi: (bi, 0, 0, 0)),
                pl.BlockSpec((k, k, c), lambda bi: (0, 0, 0)),
                pl.BlockSpec((c, c_out), lambda bi: (0, 0)),
            ],
            out_specs=pl.BlockSpec((1, out_h, out_w, c_out),
                                   lambda bi: (bi, 0, 0, 0)),
        ),
        compiler_params=pltpu.CompilerParams(
            dimension_semantics=("parallel",),
        ),
    )(x_pad, dw, pw)

    # NHWC -> NCHW to match the PyTorch module's output layout.
    return jnp.transpose(out_nhwc, (0, 3, 1, 2))


def _reference(x, dw_weight, pw_weight, padding):
    """Pure-JAX reference: depthwise conv + pointwise conv via lax.conv."""
    c = x.shape[1]
    dw_out = lax.conv_general_dilated(
        x, dw_weight, window_strides=(1, 1),
        padding=[(padding, padding), (padding, padding)],
        dimension_numbers=("NCHW", "OIHW", "NCHW"),
        feature_group_count=c)
    return lax.conv_general_dilated(
        dw_out, pw_weight, window_strides=(1, 1), padding="VALID",
        dimension_numbers=("NCHW", "OIHW", "NCHW"))


if __name__ == "__main__":
    key = jax.random.PRNGKey(0)
    kx, kd, kp = jax.random.split(key, 3)

    B, C, H, W = 2, 4, 16, 16       # small EEG-style feature map
    C_OUT, K, PAD = 8, 3, 1

    x = jax.random.normal(kx, (B, C, H, W), dtype=jnp.float32)
    dw_weight = 0.1 * jax.random.normal(kd, (C, 1, K, K), dtype=jnp.float32)
    pw_weight = 0.1 * jax.random.normal(kp, (C_OUT, C, 1, 1), dtype=jnp.float32)

    y = separable_conv2d(x, dw_weight, pw_weight, padding=PAD)
    y = jax.block_until_ready(y)

    y_ref = _reference(x, dw_weight, pw_weight, PAD)
    assert y.shape == y_ref.shape == (B, C_OUT, H, W), y.shape
    assert y.dtype == x.dtype
    err = float(jnp.max(jnp.abs(y - y_ref)))
    assert err < 1e-4, f"max abs error vs lax.conv reference: {err}"

    print("KERNEL_OK")
</pallas_src>

<mosaic_0001>
module attributes {stable_mosaic.version = 11 : i64} {
  func.func @_sepconv_kernel(%arg0: i32, %arg1: memref<1x18x18x4xf32, #tpu.memory_space<vmem>>, %arg2: memref<3x3x4xf32, #tpu.memory_space<vmem>>, %arg3: memref<4x8xf32, #tpu.memory_space<vmem>>, %arg4: memref<1x16x16x8xf32, #tpu.memory_space<vmem>>) attributes {dimension_semantics = [#tpu.dimension_semantics<parallel>], iteration_bounds = array<i64: 2>, scalar_prefetch = 0 : i64, scratch_operands = 0 : i64, tpu.core_type = #tpu.core_type<tc>, window_params = [{transform_indices = @transform_0, window_bounds = array<i64: 1, 18, 18, 4>}, {pipeline_mode = #tpu.pipeline_mode<synchronous>, transform_indices = @transform_1, window_bounds = array<i64: 3, 3, 4>}, {pipeline_mode = #tpu.pipeline_mode<synchronous>, transform_indices = @transform_2, window_bounds = array<i64: 4, 8>}, {transform_indices = @transform_3, window_bounds = array<i64: 1, 16, 16, 8>}]} {
    %c0 = arith.constant 0 : index
    %c0_0 = arith.constant 0 : index
    %c0_1 = arith.constant 0 : index
    %c0_2 = arith.constant 0 : index
    %0 = vector.load %arg1[%c0, %c0_0, %c0_1, %c0_2] : memref<1x18x18x4xf32, #tpu.memory_space<vmem>>, vector<1x18x18x4xf32>
    %1 = vector.shape_cast %0 : vector<1x18x18x4xf32> to vector<18x18x4xf32>
    %c0_3 = arith.constant 0 : index
    %c0_4 = arith.constant 0 : index
    %c0_5 = arith.constant 0 : index
    %2 = vector.load %arg2[%c0_3, %c0_4, %c0_5] : memref<3x3x4xf32, #tpu.memory_space<vmem>>, vector<3x3x4xf32>
    %c0_6 = arith.constant 0 : index
    %c0_7 = arith.constant 0 : index
    %3 = vector.load %arg3[%c0_6, %c0_7] : memref<4x8xf32, #tpu.memory_space<vmem>>, vector<4x8xf32>
    %cst = arith.constant 0.000000e+00 : f32
    %4 = vector.broadcast %cst : f32 to vector<16x16x4xf32>
    %5 = vector.extract_strided_slice %1 {offsets = [0, 0, 0], sizes = [16, 16, 4], strides = [1, 1, 1]} : vector<18x18x4xf32> to vector<16x16x4xf32>
    %6 = vector.extract_strided_slice %2 {offsets = [0, 0, 0], sizes = [1, 1, 4], strides = [1, 1, 1]} : vector<3x3x4xf32> to vector<1x1x4xf32>
    %7 = vector.broadcast %6 : vector<1x1x4xf32> to vector<16x16x4xf32>
    %8 = arith.mulf %5, %7 : vector<16x16x4xf32>
    %9 = arith.addf %4, %8 : vector<16x16x4xf32>
    %10 = vector.extract_strided_slice %1 {offsets = [0, 1, 0], sizes = [16, 16, 4], strides = [1, 1, 1]} : vector<18x18x4xf32> to vector<16x16x4xf32>
    %11 = vector.extract_strided_slice %2 {offsets = [0, 1, 0], sizes = [1, 1, 4], strides = [1, 1, 1]} : vector<3x3x4xf32> to vector<1x1x4xf32>
    %12 = vector.broadcast %11 : vector<1x1x4xf32> to vector<16x16x4xf32>
    %13 = arith.mulf %10, %12 : vector<16x16x4xf32>
    %14 = arith.addf %9, %13 : vector<16x16x4xf32>
    %15 = vector.extract_strided_slice %1 {offsets = [0, 2, 0], sizes = [16, 16, 4], strides = [1, 1, 1]} : vector<18x18x4xf32> to vector<16x16x4xf32>
    %16 = vector.extract_strided_slice %2 {offsets = [0, 2, 0], sizes = [1, 1, 4], strides = [1, 1, 1]} : vector<3x3x4xf32> to vector<1x1x4xf32>
    %17 = vector.broadcast %16 : vector<1x1x4xf32> to vector<16x16x4xf32>
    %18 = arith.mulf %15, %17 : vector<16x16x4xf32>
    %19 = arith.addf %14, %18 : vector<16x16x4xf32>
    %20 = vector.extract_strided_slice %1 {offsets = [1, 0, 0], sizes = [16, 16, 4], strides = [1, 1, 1]} : vector<18x18x4xf32> to vector<16x16x4xf32>
    %21 = vector.extract_strided_slice %2 {offsets = [1, 0, 0], sizes = [1, 1, 4], strides = [1, 1, 1]} : vector<3x3x4xf32> to vector<1x1x4xf32>
    %22 = vector.broadcast %21 : vector<1x1x4xf32> to vector<16x16x4xf32>
    %23 = arith.mulf %20, %22 : vector<16x16x4xf32>
    %24 = arith.addf %19, %23 : vector<16x16x4xf32>
    %25 = vector.extract_strided_slice %1 {offsets = [1, 1, 0], sizes = [16, 16, 4], strides = [1, 1, 1]} : vector<18x18x4xf32> to vector<16x16x4xf32>
    %26 = vector.extract_strided_slice %2 {offsets = [1, 1, 0], sizes = [1, 1, 4], strides = [1, 1, 1]} : vector<3x3x4xf32> to vector<1x1x4xf32>
    %27 = vector.broadcast %26 : vector<1x1x4xf32> to vector<16x16x4xf32>
    %28 = arith.mulf %25, %27 : vector<16x16x4xf32>
    %29 = arith.addf %24, %28 : vector<16x16x4xf32>
    %30 = vector.extract_strided_slice %1 {offsets = [1, 2, 0], sizes = [16, 16, 4], strides = [1, 1, 1]} : vector<18x18x4xf32> to vector<16x16x4xf32>
    %31 = vector.extract_strided_slice %2 {offsets = [1, 2, 0], sizes = [1, 1, 4], strides = [1, 1, 1]} : vector<3x3x4xf32> to vector<1x1x4xf32>
    %32 = vector.broadcast %31 : vector<1x1x4xf32> to vector<16x16x4xf32>
    %33 = arith.mulf %30, %32 : vector<16x16x4xf32>
    %34 = arith.addf %29, %33 : vector<16x16x4xf32>
    %35 = vector.extract_strided_slice %1 {offsets = [2, 0, 0], sizes = [16, 16, 4], strides = [1, 1, 1]} : vector<18x18x4xf32> to vector<16x16x4xf32>
    %36 = vector.extract_strided_slice %2 {offsets = [2, 0, 0], sizes = [1, 1, 4], strides = [1, 1, 1]} : vector<3x3x4xf32> to vector<1x1x4xf32>
    %37 = vector.broadcast %36 : vector<1x1x4xf32> to vector<16x16x4xf32>
    %38 = arith.mulf %35, %37 : vector<16x16x4xf32>
    %39 = arith.addf %34, %38 : vector<16x16x4xf32>
    %40 = vector.extract_strided_slice %1 {offsets = [2, 1, 0], sizes = [16, 16, 4], strides = [1, 1, 1]} : vector<18x18x4xf32> to vector<16x16x4xf32>
    %41 = vector.extract_strided_slice %2 {offsets = [2, 1, 0], sizes = [1, 1, 4], strides = [1, 1, 1]} : vector<3x3x4xf32> to vector<1x1x4xf32>
    %42 = vector.broadcast %41 : vector<1x1x4xf32> to vector<16x16x4xf32>
    %43 = arith.mulf %40, %42 : vector<16x16x4xf32>
    %44 = arith.addf %39, %43 : vector<16x16x4xf32>
    %45 = vector.extract_strided_slice %1 {offsets = [2, 2, 0], sizes = [16, 16, 4], strides = [1, 1, 1]} : vector<18x18x4xf32> to vector<16x16x4xf32>
    %46 = vector.extract_strided_slice %2 {offsets = [2, 2, 0], sizes = [1, 1, 4], strides = [1, 1, 1]} : vector<3x3x4xf32> to vector<1x1x4xf32>
    %47 = vector.broadcast %46 : vector<1x1x4xf32> to vector<16x16x4xf32>
    %48 = arith.mulf %45, %47 : vector<16x16x4xf32>
    %49 = arith.addf %44, %48 : vector<16x16x4xf32>
    %50 = vector.shape_cast %49 : vector<16x16x4xf32> to vector<256x4xf32>
    %cst_8 = arith.constant dense<0.000000e+00> : vector<256x8xf32>
    %51 = tpu.matmul %50, %3, %cst_8 {dimension_numbers = #tpu.dot_dimension_numbers<[1], [0], [0], [1], [0, 0, 1, 1], [], []>} : vector<256x4xf32>, vector<4x8xf32>, vector<256x8xf32> -> vector<256x8xf32>
    %52 = vector.shape_cast %51 : vector<256x8xf32> to vector<16x16x8xf32>
    %c0_9 = arith.constant 0 : index
    %c0_10 = arith.constant 0 : index
    %c0_11 = arith.constant 0 : index
    %c0_12 = arith.constant 0 : index
    %53 = vector.load %arg4[%c0_9, %c0_10, %c0_11, %c0_12] : memref<1x16x16x8xf32, #tpu.memory_space<vmem>>, vector<1x16x16x8xf32>
    %54 = vector.shape_cast %53 : vector<1x16x16x8xf32> to vector<16x16x8xf32>
    %55 = vector.shape_cast %52 : vector<16x16x8xf32> to vector<1x16x16x8xf32>
    tpu.vector_store %arg4[%c0_9, %c0_10, %c0_11, %c0_12], %55 {strides = array<i32>} : memref<1x16x16x8xf32, #tpu.memory_space<vmem>>, vector<1x16x16x8xf32>,
    return
  }
  func.func @transform_0(%arg0: i32) -> (i32, i32, i32, i32) {
    %c0_i32 = arith.constant 0 : i32
    %c0_i32_0 = arith.constant 0 : i32
    %c0_i32_1 = arith.constant 0 : i32
    %c0_i32_2 = arith.constant 0 : i32
    return %arg0, %c0_i32, %c0_i32_0, %c0_i32_1 : i32, i32, i32, i32
  }
  func.func @transform_1(%arg0: i32) -> (i32, i32, i32) {
    %c0_i32 = arith.constant 0 : i32
    %c0_i32_0 = arith.constant 0 : i32
    %c0_i32_1 = arith.constant 0 : i32
    %c0_i32_2 = arith.constant 0 : i32
    return %c0_i32, %c0_i32_0, %c0_i32_1 : i32, i32, i32
  }
  func.func @transform_2(%arg0: i32) -> (i32, i32) {
    %c0_i32 = arith.constant 0 : i32
    %c0_i32_0 = arith.constant 0 : i32
    %c0_i32_1 = arith.constant 0 : i32
    return %c0_i32, %c0_i32_0 : i32, i32
  }
  func.func @transform_3(%arg0: i32) -> (i32, i32, i32, i32) {
    %c0_i32 = arith.constant 0 : i32
    %c0_i32_0 = arith.constant 0 : i32
    %c0_i32_1 = arith.constant 0 : i32
    %c0_i32_2 = arith.constant 0 : i32
    return %arg0, %c0_i32, %c0_i32_0, %c0_i32_1 : i32, i32, i32, i32
  }
}

</mosaic_0001>

<llo_original>
// kernel: tpu_custom_call.1
$region0: #{tpu_custom_call.1}
  #allocation0 [shape = 'u32[]', space=smem, size = 0x4, offset = 0x4, fixed_abs, tag = 'smem constant byte address 0x4 - core index']
  #allocation1 [shape = 'u32[72,128]{1,0:T(1,128)}', space=vmem, size = 0x9000, scoped, tag = 'internal scratch']
  %s0 = inlined_call_operand.vmem [shape: f32[2,18,18,4], index: 0, kind: input, shape index: {}]
  %s1 = inlined_call_operand.vmem [shape: f32[3,3,4], index: 1, kind: input, shape index: {}]
  %s2 = inlined_call_operand.vmem [shape: f32[4,8], index: 2, kind: input, shape index: {}]
  %s3 = inlined_call_operand.vmem [shape: f32[2,16,16,8], index: 3, kind: output, shape index: {}]
  %s4 = sld [smem:[#allocation0]]
  $region45: #{tpu_custom_call.1} parent=0
    _
  %s6 = ssub.s32 1, %s4
  %s7 = scalar_select 0, %s6, %s4
  loop: start=0, step=1, limit=4
  $region2: #{tpu_custom_call.1} parent=0 // loop_pre_header
    _
  $region3: #{tpu_custom_call.1} parent=0 // loop_header
    %s9 = sphi 0, %s13
    %p10 = scmp.ge.s32.totalorder %s9, 4
    %s19 = sphi 0, %s21
    %s22 = sphi 0, %s19
    %s23 = sphi 0, %s22
    %s39 = sphi 0, %s23
    %s43 = sphi 0, %s43
    %s45 = sphi 0, %s43
    %s46 = sphi 0, %s45
    %s60 = sphi 0, %s46
    %s64 = sphi 0, %s64
    %s66 = sphi 0, %s64
    %s67 = sphi 0, %s66
    %s81 = sphi 0, %s67
    %s87 = sphi 0, %s89
    %s90 = sphi 0, %s87
    %s91 = sphi 0, %s90
    %s107 = sphi 0, %s91
  $region4: #{tpu_custom_call.1} parent=0 // loop_header_branch
    %12 = sbr.rel (%p10) target = $region8
  $region5: #{tpu_custom_call.1} parent=0 // loop_body
    %s14 = ssub.s32 %s9, 1
    %s15 = ssub.s32 %s9, 2
    %s16 = sadd.s32 %s9, 1
    %s17 = ssub.s32 %s9, %s16
    %p18 = scmp.eq.s32.totalorder %s17, 0
    %s20 = sadd.s32 %s19, 1
    %s21 = scalar_select %p18, %s19, %s20
    %p24 = pneg %p18
    %p25 = scmp.eq.s32.totalorder %s9, 1
    %p26 = por %p24, %p25
    %p27 = scmp.ne.s32.totalorder %s19, %s22
    %p28 = scmp.eq.s32.totalorder %s9, 0
    %p29 = por %p27, %p28
    %p30 = scmp.ne.s32.totalorder %s19, %s22
    %p31 = scmp.eq.s32.totalorder %s14, 1
    %p32 = por %p30, %p31
    %p33 = scmp.ne.s32.totalorder %s22, %s23
    %p34 = scmp.eq.s32.totalorder %s14, 0
    %p35 = por %p33, %p34
    %p36 = scmp.ne.s32.totalorder %s22, %s23
    %p37 = scmp.eq.s32.totalorder %s15, 1
    %p38 = por %p36, %p37
    %p40 = scmp.ne.s32.totalorder %s23, %s39
    %p41 = scmp.eq.s32.totalorder %s15, 0
    %p42 = por %p40, %p41
    %s44 = sadd.s32 %s43, 1
    %p47 = scmp.eq.s32.totalorder %s9, 1
    %p48 = scmp.ne.s32.totalorder %s43, %s45
    %p49 = scmp.eq.s32.totalorder %s9, 0
    %p50 = por %p48, %p49
    %p51 = scmp.ne.s32.totalorder %s43, %s45
    %p52 = scmp.eq.s32.totalorder %s14, 1
    %p53 = por %p51, %p52
    %p54 = scmp.ne.s32.totalorder %s45, %s46
    %p55 = scmp.eq.s32.totalorder %s14, 0
    %p56 = por %p54, %p55
    %p57 = scmp.ne.s32.totalorder %s45, %s46
    %p58 = scmp.eq.s32.totalorder %s15, 1
    %p59 = por %p57, %p58
    %p61 = scmp.ne.s32.totalorder %s46, %s60
    %p62 = scmp.eq.s32.totalorder %s15, 0
    %p63 = por %p61, %p62
    %s65 = sadd.s32 %s64, 1
    %p68 = scmp.eq.s32.totalorder %s9, 1
    %p69 = scmp.ne.s32.totalorder %s64, %s66
    %p70 = scmp.eq.s32.totalorder %s9, 0
    %p71 = por %p69, %p70
    %p72 = scmp.ne.s32.totalorder %s64, %s66
    %p73 = scmp.eq.s32.totalorder %s14, 1
    %p74 = por %p72, %p73
    %p75 = scmp.ne.s32.totalorder %s66, %s67
    %p76 = scmp.eq.s32.totalorder %s14, 0
    %p77 = por %p75, %p76
    %p78 = scmp.ne.s32.totalorder %s66, %s67
    %p79 = scmp.eq.s32.totalorder %s15, 1
    %p80 = por %p78, %p79
    %p82 = scmp.ne.s32.totalorder %s67, %s81
    %p83 = scmp.eq.s32.totalorder %s15, 0
    %p84 = por %p82, %p83
    %s85 = ssub.s32 %s9, %s16
    %p86 = scmp.eq.s32.totalorder %s85, 0
    %s88 = sadd.s32 %s87, 1
    %s89 = scalar_select %p86, %s87, %s88
    %p92 = pneg %p86
    %p93 = scmp.eq.s32.totalorder %s9, 1
    %p94 = por %p92, %p93
    %p95 = scmp.ne.s32.totalorder %s87, %s90
    %p96 = scmp.eq.s32.totalorder %s9, 0
    %p97 = por %p95, %p96
    %p98 = scmp.ne.s32.totalorder %s87, %s90
    %p99 = scmp.eq.s32.totalorder %s14, 1
    %p100 = por %p98, %p99
    %p101 = scmp.ne.s32.totalorder %s90, %s91
    %p102 = scmp.eq.s32.totalorder %s14, 0
    %p103 = por %p101, %p102
    %p104 = scmp.ne.s32.totalorder %s90, %s91
    %p105 = scmp.eq.s32.totalorder %s15, 1
    %p106 = por %p104, %p105
    %p108 = scmp.ne.s32.totalorder %s91, %s107
    %p109 = scmp.eq.s32.totalorder %s15, 0
    %p110 = por %p108, %p109
    %p111 = scmp.le.s32.totalorder 1, %s9
    %p112 = scmp.lt.s32.totalorder %s9, 3
    %p113 = pnand %p111, %p112
    %p114 = pneg %p113
    // Predicated region
    $region9: #{tpu_custom_call.1} parent=5 // pred_check
      _
    $region10: #{tpu_custom_call.1} parent=5 // pred_check_branch
      %116 = sbr.rel (%p113) target = $region12
    $region11: #{tpu_custom_call.1} parent=5 // pred_region
      %s117 = ssub.s32 %s9, 1
      // Predicated region
      $region13: #{tpu_custom_call.1} parent=11 // pred_check
        %p118 = pneg %p56
      $region14: #{tpu_custom_call.1} parent=11 // pred_check_branch
        %120 = sbr.rel (%p118) target = $region16
      $region15: #{tpu_custom_call.1} parent=11 // pred_region
        _
      $region16: #{tpu_custom_call.1} parent=11 // pred_fallthru
        _
      // Predicated region
      $region17: #{tpu_custom_call.1} parent=11 // pred_check
        %p121 = pneg %p77
      $region18: #{tpu_custom_call.1} parent=11 // pred_check_branch
        %123 = sbr.rel (%p121) target = $region20
      $region19: #{tpu_custom_call.1} parent=11 // pred_region
        _
      $region20: #{tpu_custom_call.1} parent=11 // pred_fallthru
        _
    $region12: #{tpu_custom_call.1} parent=5 // pred_fallthru
      _
    %p124 = scmp.lt.s32.totalorder %s9, 2
    // Predicated region
    $region21: #{tpu_custom_call.1} parent=5 // pred_check
      %p125 = pneg %p124
    $region22: #{tpu_custom_call.1} parent=5 // pred_check_branch
      %127 = sbr.rel (%p125) target = $region24
    $region23: #{tpu_custom_call.1} parent=5 // pred_region
      // Predicated region
      $region25: #{tpu_custom_call.1} parent=23 // pred_check
        %p128 = pneg %p29
      $region26: #{tpu_custom_call.1} parent=23 // pred_check_branch
        %130 = sbr.rel (%p128) target = $region28
      $region27: #{tpu_custom_call.1} parent=23 // pred_region
        %p131 = scmp.lt.s32.totalorder %s9, 1
        %s132 = scalar_select %p131, %s9, 1
        %s133 = smul.addr %s132, 54
        %s134 = smul.addr %s133, 8
        %s135 = scalar_lea.vmem %s0, %s134
      $region28: #{tpu_custom_call.1} parent=23 // pred_fallthru
        _
    $region24: #{tpu_custom_call.1} parent=5 // pred_fallthru
      _
    %p136 = scmp.le.s32.totalorder 1, %s9
    %p137 = scmp.lt.s32.totalorder %s9, 3
    %p138 = pnand %p136, %p137
    %p139 = pneg %p138
    // Predicated region
    $region29: #{tpu_custom_call.1} parent=5 // pred_check
      _
    $region30: #{tpu_custom_call.1} parent=5 // pred_check_branch
      %141 = sbr.rel (%p138) target = $region32
    $region31: #{tpu_custom_call.1} parent=5 // pred_region
      %s142 = ssub.s32 %s9, 1
      %p143 = scmp.lt.s32.totalorder %s14, 1
      %s144 = scalar_select %p143, %s14, 1
      %s145 = smul.addr %s144, 54
      %s146 = smul.addr %s145, 8
      %s147 = scalar_lea.vmem %s0, %s146
      %p148 = pneg %p35
      %p149 = pneg %p32
      %p150 = pneg %p56
      %p151 = pneg %p53
      %p152 = pneg %p77
      %p153 = pneg %p74
      %p154 = pneg %p103
      %p155 = pneg %p100
      %p156 = scmp.lt.s32.totalorder %s14, 1
      %s157 = scalar_select %p156, %s14, 1
      %s158 = smul.addr %s157, 32
      %s159 = smul.addr %s158, 8
      %s160 = scalar_lea.vmem %s3, %s159
      %p161 = scmp.lt.s32.totalorder %s14, 1
      %s162 = scalar_select %p161, %s14, 1
      %s163 = smul.addr %s162, 54
      %s164 = smul.addr %s163, 8
      %s165 = scalar_lea.vmem %s0, %s164
      %p166 = scmp.lt.s32.totalorder %s14, 1
      %s167 = scalar_select %p166, %s14, 1
      %s168 = smul.addr %s167, 32
      %s169 = smul.addr %s168, 8
      %s170 = scalar_lea.vmem %s3, %s169
      %v171 = vld [vmem:[%s165] sm:$0xff]
      %v172 = vld [vmem:[%s165 + $0x8] sm:$0xff]
      %v173 = vld [vmem:[%s165 + $0x10] sm:$0x3]
      %v174 = vld [vmem:[%s165 + $0x18] sm:$0xff]
      %v175 = vld [vmem:[%s165 + $0x20] sm:$0xff]
      %v176 = vld [vmem:[%s165 + $0x28] sm:$0x3]
      %v177 = vld [vmem:[%s165 + $0x30] sm:$0xff]
      %v178 = vld [vmem:[%s165 + $0x38] sm:$0xff]
      %v179 = vld [vmem:[%s165 + $0x40] sm:$0x3]
      %v180 = vld [vmem:[%s165 + $0x48] sm:$0xff]
      %v181 = vld [vmem:[%s165 + $0x50] sm:$0xff]
      %v182 = vld [vmem:[%s165 + $0x58] sm:$0x3]
      %v183 = vld [vmem:[%s165 + $0x60] sm:$0xff]
      %v184 = vld [vmem:[%s165 + $0x68] sm:$0xff]
      %v185 = vld [vmem:[%s165 + $0x70] sm:$0x3]
      %v186 = vld [vmem:[%s165 + $0x78] sm:$0xff]
      %v187 = vld [vmem:[%s165 + $0x80] sm:$0xff]
      %v188 = vld [vmem:[%s165 + $0x88] sm:$0x3]
      %v189 = vld [vmem:[%s165 + $0x90] sm:$0xff]
      %v190 = vld [vmem:[%s165 + $0x98] sm:$0xff]
      %v191 = vld [vmem:[%s165 + $0xa0] sm:$0x3]
      %v192 = vld [vmem:[%s165 + $0xa8] sm:$0xff]
      %v193 = vld [vmem:[%s165 + $0xb0] sm:$0xff]
      %v194 = vld [vmem:[%s165 + $0xb8] sm:$0x3]
      %v195 = vld [vmem:[%s165 + $0xc0] sm:$0xff]
      %v196 = vld [vmem:[%s165 + $0xc8] sm:$0xff]
      %v197 = vld [vmem:[%s165 + $0xd0] sm:$0x3]
      %v198 = vld [vmem:[%s165 + $0xd8] sm:$0xff]
      %v199 = vld [vmem:[%s165 + $0xe0] sm:$0xff]
      %v200 = vld [vmem:[%s165 + $0xe8] sm:$0x3]
      %v201 = vld [vmem:[%s165 + $0xf0] sm:$0xff]
      %v202 = vld [vmem:[%s165 + $0xf8] sm:$0xff]
      %v203 = vld [vmem:[%s165 + $0x100] sm:$0x3]
      %v204 = vld [vmem:[%s165 + $0x108] sm:$0xff]
      %v205 = vld [vmem:[%s165 + $0x110] sm:$0xff]
      %v206 = vld [vmem:[%s165 + $0x118] sm:$0x3]
      %v207 = vld [vmem:[%s165 + $0x120] sm:$0xff]
      %v208 = vld [vmem:[%s165 + $0x128] sm:$0xff]
      %v209 = vld [vmem:[%s165 + $0x130] sm:$0x3]
      %v210 = vld [vmem:[%s165 + $0x138] sm:$0xff]
      %v211 = vld [vmem:[%s165 + $0x140] sm:$0xff]
      %v212 = vld [vmem:[%s165 + $0x148] sm:$0x3]
      %v213 = vld [vmem:[%s165 + $0x150] sm:$0xff]
      %v214 = vld [vmem:[%s165 + $0x158] sm:$0xff]
      %v215 = vld [vmem:[%s165 + $0x160] sm:$0x3]
      %v216 = vld [vmem:[%s165 + $0x168] sm:$0xff]
      %v217 = vld [vmem:[%s165 + $0x170] sm:$0xff]
      %v218 = vld [vmem:[%s165 + $0x178] sm:$0x3]
      %v219 = vld [vmem:[%s165 + $0x180] sm:$0xff]
      %v220 = vld [vmem:[%s165 + $0x188] sm:$0xff]
      %v221 = vld [vmem:[%s165 + $0x190] sm:$0x3]
      %v222 = vld [vmem:[%s165 + $0x198] sm:$0xff]
      %v223 = vld [vmem:[%s165 + $0x1a0] sm:$0xff]
      %v224 = vld [vmem:[%s165 + $0x1a8] sm:$0x3]
      %v225 = vld [vmem:[%s1] sm:$0x7]
      %v226 = vld [vmem:[%s1 + $0x4] sm:$0x7]
      %v227 = vld [vmem:[%s1 + $0x8] sm:$0x7]
      %v228 = vld [vmem:[%s2] sm:$0xf]
      %v229 = vperm.slane %v225, 0
      %v230 = vmul.f32 %v171, %v229
      %v231 = vmul.f32 %v172, %v229
      %v232 = vmul.f32 %v174, %v229
      %v233 = vmul.f32 %v175, %v229
      %v234 = vmul.f32 %v177, %v229
      %v235 = vmul.f32 %v178, %v229
      %v236 = vmul.f32 %v180, %v229
      %v237 = vmul.f32 %v181, %v229
      %v238 = vmul.f32 %v183, %v229
      %v239 = vmul.f32 %v184, %v229
      %v240 = vmul.f32 %v186, %v229
      %v241 = vmul.f32 %v187, %v229
      %v242 = vmul.f32 %v189, %v229
      %v243 = vmul.f32 %v190, %v229
      %v244 = vmul.f32 %v192, %v229
      %v245 = vmul.f32 %v193, %v229
      %v246 = vmul.f32 %v195, %v229
      %v247 = vmul.f32 %v196, %v229
      %v248 = vmul.f32 %v198, %v229
      %v249 = vmul.f32 %v199, %v229
      %v250 = vmul.f32 %v201, %v229
      %v251 = vmul.f32 %v202, %v229
      %v252 = vmul.f32 %v204, %v229
      %v253 = vmul.f32 %v205, %v229
      %v254 = vmul.f32 %v207, %v229
      %v255 = vmul.f32 %v208, %v229
      %v256 = vmul.f32 %v210, %v229
      %v257 = vmul.f32 %v211, %v229
      %v258 = vmul.f32 %v213, %v229
      %v259 = vmul.f32 %v214, %v229
      %v260 = vmul.f32 %v216, %v229
      %v261 = vmul.f32 %v217, %v229
      %v262 = vadd.f32 %v230, 0.0
      %v263 = vadd.f32 %v231, 0.0
      %v264 = vadd.f32 %v232, 0.0
      %v265 = vadd.f32 %v233, 0.0
      %v266 = vadd.f32 %v234, 0.0
      %v267 = vadd.f32 %v235, 0.0
      %v268 = vadd.f32 %v236, 0.0
      %v269 = vadd.f32 %v237, 0.0
      %v270 = vadd.f32 %v238, 0.0
      %v271 = vadd.f32 %v239, 0.0
      %v272 = vadd.f32 %v240, 0.0
      %v273 = vadd.f32 %v241, 0.0
      %v274 = vadd.f32 %v242, 0.0
      %v275 = vadd.f32 %v243, 0.0
      %v276 = vadd.f32 %v244, 0.0
      %v277 = vadd.f32 %v245, 0.0
      %v278 = vadd.f32 %v246, 0.0
      %v279 = vadd.f32 %v247, 0.0
      %v280 = vadd.f32 %v248, 0.0
      %v281 = vadd.f32 %v249, 0.0
      %v282 = vadd.f32 %v250, 0.0
      %v283 = vadd.f32 %v251, 0.0
      %v284 = vadd.f32 %v252, 0.0
      %v285 = vadd.f32 %v253, 0.0
      %v286 = vadd.f32 %v254, 0.0
      %v287 = vadd.f32 %v255, 0.0
      %v288 = vadd.f32 %v256, 0.0
      %v289 = vadd.f32 %v257, 0.0
      %v290 = vadd.f32 %v258, 0.0
      %v291 = vadd.f32 %v259, 0.0
      %v292 = vadd.f32 %v260, 0.0
      %v293 = vadd.f32 %v261, 0.0
      %v294 = vperm.slane %v225, 1
      %v295 = vmul.f32 %v171, %v294
      %v296 = vmul.f32 %v172, %v294
      %v297 = vmul.f32 %v173, %v294
      %v298 = vmul.f32 %v174, %v294
      %v299 = vmul.f32 %v175, %v294
      %v300 = vmul.f32 %v176, %v294
      %v301 = vmul.f32 %v177, %v294
      %v302 = vmul.f32 %v178, %v294
      %v303 = vmul.f32 %v179, %v294
      %v304 = vmul.f32 %v180, %v294
      %v305 = vmul.f32 %v181, %v294
      %v306 = vmul.f32 %v182, %v294
      %v307 = vmul.f32 %v183, %v294
      %v308 = vmul.f32 %v184, %v294
      %v309 = vmul.f32 %v185, %v294
      %v310 = vmul.f32 %v186, %v294
      %v311 = vmul.f32 %v187, %v294
      %v312 = vmul.f32 %v188, %v294
      %v313 = vmul.f32 %v189, %v294
      %v314 = vmul.f32 %v190, %v294
      %v315 = vmul.f32 %v191, %v294
      %v316 = vmul.f32 %v192, %v294
      %v317 = vmul.f32 %v193, %v294
      %v318 = vmul.f32 %v194, %v294
      %v319 = vmul.f32 %v195, %v294
      %v320 = vmul.f32 %v196, %v294
      %v321 = vmul.f32 %v197, %v294
      %v322 = vmul.f32 %v198, %v294
      %v323 = vmul.f32 %v199, %v294
      %v324 = vmul.f32 %v200, %v294
      %v325 = vmul.f32 %v201, %v294
      %v326 = vmul.f32 %v202, %v294
      %v327 = vmul.f32 %v203, %v294
      %v328 = vmul.f32 %v204, %v294
      %v329 = vmul.f32 %v205, %v294
      %v330 = vmul.f32 %v206, %v294
      %v331 = vmul.f32 %v207, %v294
      %v332 = vmul.f32 %v208, %v294
      %v333 = vmul.f32 %v209, %v294
      %v334 = vmul.f32 %v210, %v294
      %v335 = vmul.f32 %v211, %v294
      %v336 = vmul.f32 %v212, %v294
      %v337 = vmul.f32 %v213, %v294
      %v338 = vmul.f32 %v214, %v294
      %v339 = vmul.f32 %v215, %v294
      %v340 = vmul.f32 %v216, %v294
      %v341 = vmul.f32 %v217, %v294
      %v342 = vmul.f32 %v218, %v294
      %vm391 = vcmask 1046528
      %v392 = vrot.slane %v295, 1
      %v393 = vrot.slane %v296, 1
      %v394 = vsel %vm391, %v392, %v393
      %v395 = vrot.slane %v297, 1
      %v396 = vsel %vm391, %v393, %v395
      %v397 = vrot.slane %v298, 1
      %v398 = vrot.slane %v299, 1
      %v399 = vsel %vm391, %v397, %v398
      %v400 = vrot.slane %v300, 1
      %v401 = vsel %vm391, %v398, %v400
      %v402 = vrot.slane %v301, 1
      %v403 = vrot.slane %v302, 1
      %v404 = vsel %vm391, %v402, %v403
      %v405 = vrot.slane %v303, 1
      %v406 = vsel %vm391, %v403, %v405
      %v407 = vrot.slane %v304, 1
      %v408 = vrot.slane %v305, 1
      %v409 = vsel %vm391, %v407, %v408
      %v410 = vrot.slane %v306, 1
      %v411 = vsel %vm391, %v408, %v410
      %v412 = vrot.slane %v307, 1
      %v413 = vrot.slane %v308, 1
      %v414 = vsel %vm391, %v412, %v413
      %v415 = vrot.slane %v309, 1
      %v416 = vsel %vm391, %v413, %v415
      %v417 = vrot.slane %v310, 1
      %v418 = vrot.slane %v311, 1
      %v419 = vsel %vm391, %v417, %v418
      %v420 = vrot.slane %v312, 1
      %v421 = vsel %vm391, %v418, %v420
      %v422 = vrot.slane %v313, 1
      %v423 = vrot.slane %v314, 1
      %v424 = vsel %vm391, %v422, %v423
      %v425 = vrot.slane %v315, 1
      %v426 = vsel %vm391, %v423, %v425
      %v427 = vrot.slane %v316, 1
      %v428 = vrot.slane %v317, 1
      %v429 = vsel %vm391, %v427, %v428
      %v430 = vrot.slane %v318, 1
      %v431 = vsel %vm391, %v428, %v430
      %v432 = vrot.slane %v319, 1
      %v433 = vrot.slane %v320, 1
      %v434 = vsel %vm391, %v432, %v433
      %v435 = vrot.slane %v321, 1
      %v436 = vsel %vm391, %v433, %v435
      %v437 = vrot.slane %v322, 1
      %v438 = vrot.slane %v323, 1
      %v439 = vsel %vm391, %v437, %v438
      %v440 = vrot.slane %v324, 1
      %v441 = vsel %vm391, %v438, %v440
      %v442 = vrot.slane %v325, 1
      %v443 = vrot.slane %v326, 1
      %v444 = vsel %vm391, %v442, %v443
      %v445 = vrot.slane %v327, 1
      %v446 = vsel %vm391, %v443, %v445
      %v447 = vrot.slane %v328, 1
      %v448 = vrot.slane %v329, 1
      %v449 = vsel %vm391, %v447, %v448
      %v450 = vrot.slane %v330, 1
      %v451 = vsel %vm391, %v448, %v450
      %v452 = vrot.slane %v331, 1
      %v453 = vrot.slane %v332, 1
      %v454 = vsel %vm391, %v452, %v453
      %v455 = vrot.slane %v333, 1
      %v456 = vsel %vm391, %v453, %v455
      %v457 = vrot.slane %v334, 1
      %v458 = vrot.slane %v335, 1
      %v459 = vsel %vm391, %v457, %v458
      %v460 = vrot.slane %v336, 1
      %v461 = vsel %vm391, %v458, %v460
      %v462 = vrot.slane %v337, 1
      %v463 = vrot.slane %v338, 1
      %v464 = vsel %vm391, %v462, %v463
      %v465 = vrot.slane %v339, 1
      %v466 = vsel %vm391, %v463, %v465
      %v467 = vrot.slane %v340, 1
      %v468 = vrot.slane %v341, 1
      %v469 = vsel %vm391, %v467, %v468
      %v470 = vrot.slane %v342, 1
      %v471 = vsel %vm391, %v468, %v470
      %v504 = vadd.f32 %v262, %v394
      %v505 = vadd.f32 %v263, %v396
      %v506 = vadd.f32 %v264, %v399
      %v507 = vadd.f32 %v265, %v401
      %v508 = vadd.f32 %v266, %v404
      %v509 = vadd.f32 %v267, %v406
      %v510 = vadd.f32 %v268, %v409
      %v511 = vadd.f32 %v269, %v411
      %v512 = vadd.f32 %v270, %v414
      %v513 = vadd.f32 %v271, %v416
      %v514 = vadd.f32 %v272, %v419
      %v515 = vadd.f32 %v273, %v421
      %v516 = vadd.f32 %v274, %v424
      %v517 = vadd.f32 %v275, %v426
      %v518 = vadd.f32 %v276, %v429
      %v519 = vadd.f32 %v277, %v431
      %v520 = vadd.f32 %v278, %v434
      %v521 = vadd.f32 %v279, %v436
      %v522 = vadd.f32 %v280, %v439
      %v523 = vadd.f32 %v281, %v441
      %v524 = vadd.f32 %v282, %v444
      %v525 = vadd.f32 %v283, %v446
      %v526 = vadd.f32 %v284, %v449
      %v527 = vadd.f32 %v285, %v451
      %v528 = vadd.f32 %v286, %v454
      %v529 = vadd.f32 %v287, %v456
      %v530 = vadd.f32 %v288, %v459
      %v531 = vadd.f32 %v289, %v461
      %v532 = vadd.f32 %v290, %v464
      %v533 = vadd.f32 %v291, %v466
      %v534 = vadd.f32 %v292, %v469
      %v535 = vadd.f32 %v293, %v471
      %v536 = vperm.slane %v225, 2
      %v537 = vmul.f32 %v171, %v536
      %v538 = vmul.f32 %v172, %v536
      %v539 = vmul.f32 %v173, %v536
      %v540 = vmul.f32 %v174, %v536
      %v541 = vmul.f32 %v175, %v536
      %v542 = vmul.f32 %v176, %v536
      %v543 = vmul.f32 %v177, %v536
      %v544 = vmul.f32 %v178, %v536
      %v545 = vmul.f32 %v179, %v536
      %v546 = vmul.f32 %v180, %v536
      %v547 = vmul.f32 %v181, %v536
      %v548 = vmul.f32 %v182, %v536
      %v549 = vmul.f32 %v183, %v536
      %v550 = vmul.f32 %v184, %v536
      %v551 = vmul.f32 %v185, %v536
      %v552 = vmul.f32 %v186, %v536
      %v553 = vmul.f32 %v187, %v536
      %v554 = vmul.f32 %v188, %v536
      %v555 = vmul.f32 %v189, %v536
      %v556 = vmul.f32 %v190, %v536
      %v557 = vmul.f32 %v191, %v536
      %v558 = vmul.f32 %v192, %v536
      %v559 = vmul.f32 %v193, %v536
      %v560 = vmul.f32 %v194, %v536
      %v561 = vmul.f32 %v195, %v536
      %v562 = vmul.f32 %v196, %v536
      %v563 = vmul.f32 %v197, %v536
      %v564 = vmul.f32 %v198, %v536
      %v565 = vmul.f32 %v199, %v536
      %v566 = vmul.f32 %v200, %v536
      %v567 = vmul.f32 %v201, %v536
      %v568 = vmul.f32 %v202, %v536
      %v569 = vmul.f32 %v203, %v536
      %v570 = vmul.f32 %v204, %v536
      %v571 = vmul.f32 %v205, %v536
      %v572 = vmul.f32 %v206, %v536
      %v573 = vmul.f32 %v207, %v536
      %v574 = vmul.f32 %v208, %v536
      %v575 = vmul.f32 %v209, %v536
      %v576 = vmul.f32 %v210, %v536
      %v577 = vmul.f32 %v211, %v536
      %v578 = vmul.f32 %v212, %v536
      %v579 = vmul.f32 %v213, %v536
      %v580 = vmul.f32 %v214, %v536
      %v581 = vmul.f32 %v215, %v536
      %v582 = vmul.f32 %v216, %v536
      %v583 = vmul.f32 %v217, %v536
      %v584 = vmul.f32 %v218, %v536
      %vm633 = vcmask 1045504
      %v634 = vrot.slane %v537, 2
      %v635 = vrot.slane %v538, 2
      %v636 = vsel %vm633, %v634, %v635
      %v637 = vrot.slane %v539, 2
      %v638 = vsel %vm633, %v635, %v637
      %v639 = vrot.slane %v540, 2
      %v640 = vrot.slane %v541, 2
      %v641 = vsel %vm633, %v639, %v640
      %v642 = vrot.slane %v542, 2
      %v643 = vsel %vm633, %v640, %v642
      %v644 = vrot.slane %v543, 2
      %v645 = vrot.slane %v544, 2
      %v646 = vsel %vm633, %v644, %v645
      %v647 = vrot.slane %v545, 2
      %v648 = vsel %vm633, %v645, %v647
      %v649 = vrot.slane %v546, 2
      %v650 = vrot.slane %v547, 2
      %v651 = vsel %vm633, %v649, %v650
      %v652 = vrot.slane %v548, 2
      %v653 = vsel %vm633, %v650, %v652
      %v654 = vrot.slane %v549, 2
      %v655 = vrot.slane %v550, 2
      %v656 = vsel %vm633, %v654, %v655
      %v657 = vrot.slane %v551, 2
      %v658 = vsel %vm633, %v655, %v657
      %v659 = vrot.slane %v552, 2
      %v660 = vrot.slane %v553, 2
      %v661 = vsel %vm633, %v659, %v660
      %v662 = vrot.slane %v554, 2
      %v663 = vsel %vm633, %v660, %v662
      %v664 = vrot.slane %v555, 2
      %v665 = vrot.slane %v556, 2
      %v666 = vsel %vm633, %v664, %v665
      %v667 = vrot.slane %v557, 2
      %v668 = vsel %vm633, %v665, %v667
      %v669 = vrot.slane %v558, 2
      %v670 = vrot.slane %v559, 2
      %v671 = vsel %vm633, %v669, %v670
      %v672 = vrot.slane %v560, 2
      %v673 = vsel %vm633, %v670, %v672
      %v674 = vrot.slane %v561, 2
      %v675 = vrot.slane %v562, 2
      %v676 = vsel %vm633, %v674, %v675
      %v677 = vrot.slane %v563, 2
      %v678 = vsel %vm633, %v675, %v677
      %v679 = vrot.slane %v564, 2
      %v680 = vrot.slane %v565, 2
      %v681 = vsel %vm633, %v679, %v680
      %v682 = vrot.slane %v566, 2
      %v683 = vsel %vm633, %v680, %v682
      %v684 = vrot.slane %v567, 2
      %v685 = vrot.slane %v568, 2
      %v686 = vsel %vm633, %v684, %v685
      %v687 = vrot.slane %v569, 2
      %v688 = vsel %vm633, %v685, %v687
      %v689 = vrot.slane %v570, 2
      %v690 = vrot.slane %v571, 2
      %v691 = vsel %vm633, %v689, %v690
      %v692 = vrot.slane %v572, 2
      %v693 = vsel %vm633, %v690, %v692
      %v694 = vrot.slane %v573, 2
      %v695 = vrot.slane %v574, 2
      %v696 = vsel %vm633, %v694, %v695
      %v697 = vrot.slane %v575, 2
      %v698 = vsel %vm633, %v695, %v697
      %v699 = vrot.slane %v576, 2
      %v700 = vrot.slane %v577, 2
      %v701 = vsel %vm633, %v699, %v700
      %v702 = vrot.slane %v578, 2
      %v703 = vsel %vm633, %v700, %v702
      %v704 = vrot.slane %v579, 2
      %v705 = vrot.slane %v580, 2
      %v706 = vsel %vm633, %v704, %v705
      %v707 = vrot.slane %v581, 2
      %v708 = vsel %vm633, %v705, %v707
      %v709 = vrot.slane %v582, 2
      %v710 = vrot.slane %v583, 2
      %v711 = vsel %vm633, %v709, %v710
      %v712 = vrot.slane %v584, 2
      %v713 = vsel %vm633, %v710, %v712
      %v746 = vadd.f32 %v504, %v636
      %v747 = vadd.f32 %v505, %v638
      %v748 = vadd.f32 %v506, %v641
      %v749 = vadd.f32 %v507, %v643
      %v750 = vadd.f32 %v508, %v646
      %v751 = vadd.f32 %v509, %v648
      %v752 = vadd.f32 %v510, %v651
      %v753 = vadd.f32 %v511, %v653
      %v754 = vadd.f32 %v512, %v656
      %v755 = vadd.f32 %v513, %v658
      %v756 = vadd.f32 %v514, %v661
      %v757 = vadd.f32 %v515, %v663
      %v758 = vadd.f32 %v516, %v666
      %v759 = vadd.f32 %v517, %v668
      %v760 = vadd.f32 %v518, %v671
      %v761 = vadd.f32 %v519, %v673
      %v762 = vadd.f32 %v520, %v676
      %v763 = vadd.f32 %v521, %v678
      %v764 = vadd.f32 %v522, %v681
      %v765 = vadd.f32 %v523, %v683
      %v766 = vadd.f32 %v524, %v686
      %v767 = vadd.f32 %v525, %v688
      %v768 = vadd.f32 %v526, %v691
      %v769 = vadd.f32 %v527, %v693
      %v770 = vadd.f32 %v528, %v696
      %v771 = vadd.f32 %v529, %v698
      %v772 = vadd.f32 %v530, %v701
      %v773 = vadd.f32 %v531, %v703
      %v774 = vadd.f32 %v532, %v706
      %v775 = vadd.f32 %v533, %v708
      %v776 = vadd.f32 %v534, %v711
      %v777 = vadd.f32 %v535, %v713
      %v778 = vperm.slane %v226, 0
      %v779 = vmul.f32 %v174, %v778
      %v780 = vmul.f32 %v175, %v778
      %v781 = vmul.f32 %v177, %v778
      %v782 = vmul.f32 %v178, %v778
      %v783 = vmul.f32 %v180, %v778
      %v784 = vmul.f32 %v181, %v778
      %v785 = vmul.f32 %v183, %v778
      %v786 = vmul.f32 %v184, %v778
      %v787 = vmul.f32 %v186, %v778
      %v788 = vmul.f32 %v187, %v778
      %v789 = vmul.f32 %v189, %v778
      %v790 = vmul.f32 %v190, %v778
      %v791 = vmul.f32 %v192, %v778
      %v792 = vmul.f32 %v193, %v778
      %v793 = vmul.f32 %v195, %v778
      %v794 = vmul.f32 %v196, %v778
      %v795 = vmul.f32 %v198, %v778
      %v796 = vmul.f32 %v199, %v778
      %v797 = vmul.f32 %v201, %v778
      %v798 = vmul.f32 %v202, %v778
      %v799 = vmul.f32 %v204, %v778
      %v800 = vmul.f32 %v205, %v778
      %v801 = vmul.f32 %v207, %v778
      %v802 = vmul.f32 %v208, %v778
      %v803 = vmul.f32 %v210, %v778
      %v804 = vmul.f32 %v211, %v778
      %v805 = vmul.f32 %v213, %v778
      %v806 = vmul.f32 %v214, %v778
      %v807 = vmul.f32 %v216, %v778
      %v808 = vmul.f32 %v217, %v778
      %v809 = vmul.f32 %v219, %v778
      %v810 = vmul.f32 %v220, %v778
      %v811 = vadd.f32 %v746, %v779
      %v812 = vadd.f32 %v747, %v780
      %v813 = vadd.f32 %v748, %v781
      %v814 = vadd.f32 %v749, %v782
      %v815 = vadd.f32 %v750, %v783
      %v816 = vadd.f32 %v751, %v784
      %v817 = vadd.f32 %v752, %v785
      %v818 = vadd.f32 %v753, %v786
      %v819 = vadd.f32 %v754, %v787
      %v820 = vadd.f32 %v755, %v788
      %v821 = vadd.f32 %v756, %v789
      %v822 = vadd.f32 %v757, %v790
      %v823 = vadd.f32 %v758, %v791
      %v824 = vadd.f32 %v759, %v792
      %v825 = vadd.f32 %v760, %v793
      %v826 = vadd.f32 %v761, %v794
      %v827 = vadd.f32 %v762, %v795
      %v828 = vadd.f32 %v763, %v796
      %v829 = vadd.f32 %v764, %v797
      %v830 = vadd.f32 %v765, %v798
      %v831 = vadd.f32 %v766, %v799
      %v832 = vadd.f32 %v767, %v800
      %v833 = vadd.f32 %v768, %v801
      %v834 = vadd.f32 %v769, %v802
      %v835 = vadd.f32 %v770, %v803
      %v836 = vadd.f32 %v771, %v804
      %v837 = vadd.f32 %v772, %v805
      %v838 = vadd.f32 %v773, %v806
      %v839 = vadd.f32 %v774, %v807
      %v840 = vadd.f32 %v775, %v808
      %v841 = vadd.f32 %v776, %v809
      %v842 = vadd.f32 %v777, %v810
      %v843 = vperm.slane %v226, 1
      %v844 = vmul.f32 %v174, %v843
      %v845 = vmul.f32 %v175, %v843
      %v846 = vmul.f32 %v176, %v843
      %v847 = vmul.f32 %v177, %v843
      %v848 = vmul.f32 %v178, %v843
      %v849 = vmul.f32 %v179, %v843
      %v850 = vmul.f32 %v180, %v843
      %v851 = vmul.f32 %v181, %v843
      %v852 = vmul.f32 %v182, %v843
      %v853 = vmul.f32 %v183, %v843
      %v854 = vmul.f32 %v184, %v843
      %v855 = vmul.f32 %v185, %v843
      %v856 = vmul.f32 %v186, %v843
      %v857 = vmul.f32 %v187, %v843
      %v858 = vmul.f32 %v188, %v843
      %v859 = vmul.f32 %v189, %v843
      %v860 = vmul.f32 %v190, %v843
      %v861 = vmul.f32 %v191, %v843
      %v862 = vmul.f32 %v192, %v843
      %v863 = vmul.f32 %v193, %v843
      %v864 = vmul.f32 %v194, %v843
      %v865 = vmul.f32 %v195, %v843
      %v866 = vmul.f32 %v196, %v843
      %v867 = vmul.f32 %v197, %v843
      %v868 = vmul.f32 %v198, %v843
      %v869 = vmul.f32 %v199, %v843
      %v870 = vmul.f32 %v200, %v843
      %v871 = vmul.f32 %v201, %v843
      %v872 = vmul.f32 %v202, %v843
      %v873 = vmul.f32 %v203, %v843
      %v874 = vmul.f32 %v204, %v843
      %v875 = vmul.f32 %v205, %v843
      %v876 = vmul.f32 %v206, %v843
      %v877 = vmul.f32 %v207, %v843
      %v878 = vmul.f32 %v208, %v843
      %v879 = vmul.f32 %v209, %v843
      %v880 = vmul.f32 %v210, %v843
      %v881 = vmul.f32 %v211, %v843
      %v882 = vmul.f32 %v212, %v843
      %v883 = vmul.f32 %v213, %v843
      %v884 = vmul.f32 %v214, %v843
      %v885 = vmul.f32 %v215, %v843
      %v886 = vmul.f32 %v216, %v843
      %v887 = vmul.f32 %v217, %v843
      %v888 = vmul.f32 %v218, %v843
      %v889 = vmul.f32 %v219, %v843
      %v890 = vmul.f32 %v220, %v843
      %v891 = vmul.f32 %v221, %v843
      %v940 = vrot.slane %v844, 1
      %v941 = vrot.slane %v845, 1
      %v942 = vsel %vm391, %v940, %v941
      %v943 = vrot.slane %v846, 1
      %v944 = vsel %vm391, %v941, %v943
      %v945 = vrot.slane %v847, 1
      %v946 = vrot.slane %v848, 1
      %v947 = vsel %vm391, %v945, %v946
      %v948 = vrot.slane %v849, 1
      %v949 = vsel %vm391, %v946, %v948
      %v950 = vrot.slane %v850, 1
      %v951 = vrot.slane %v851, 1
      %v952 = vsel %vm391, %v950, %v951
      %v953 = vrot.slane %v852, 1
      %v954 = vsel %vm391, %v951, %v953
      %v955 = vrot.slane %v853, 1
      %v956 = vrot.slane %v854, 1
      %v957 = vsel %vm391, %v955, %v956
      %v958 = vrot.slane %v855, 1
      %v959 = vsel %vm391, %v956, %v958
      %v960 = vrot.slane %v856, 1
      %v961 = vrot.slane %v857, 1
      %v962 = vsel %vm391, %v960, %v961
      %v963 = vrot.slane %v858, 1
      %v964 = vsel %vm391, %v961, %v963
      %v965 = vrot.slane %v859, 1
      %v966 = vrot.slane %v860, 1
      %v967 = vsel %vm391, %v965, %v966
      %v968 = vrot.slane %v861, 1
      %v969 = vsel %vm391, %v966, %v968
      %v970 = vrot.slane %v862, 1
      %v971 = vrot.slane %v863, 1
      %v972 = vsel %vm391, %v970, %v971
      %v973 = vrot.slane %v864, 1
      %v974 = vsel %vm391, %v971, %v973
      %v975 = vrot.slane %v865, 1
      %v976 = vrot.slane %v866, 1
      %v977 = vsel %vm391, %v975, %v976
      %v978 = vrot.slane %v867, 1
      %v979 = vsel %vm391, %v976, %v978
      %v980 = vrot.slane %v868, 1
      %v981 = vrot.slane %v869, 1
      %v982 = vsel %vm391, %v980, %v981
      %v983 = vrot.slane %v870, 1
      %v984 = vsel %vm391, %v981, %v983
      %v985 = vrot.slane %v871, 1
      %v986 = vrot.slane %v872, 1
      %v987 = vsel %vm391, %v985, %v986
      %v988 = vrot.slane %v873, 1
      %v989 = vsel %vm391, %v986, %v988
      %v990 = vrot.slane %v874, 1
      %v991 = vrot.slane %v875, 1
      %v992 = vsel %vm391, %v990, %v991
      %v993 = vrot.slane %v876, 1
      %v994 = vsel %vm391, %v991, %v993
      %v995 = vrot.slane %v877, 1
      %v996 = vrot.slane %v878, 1
      %v997 = vsel %vm391, %v995, %v996
      %v998 = vrot.slane %v879, 1
      %v999 = vsel %vm391, %v996, %v998
      %v1000 = vrot.slane %v880, 1
      %v1001 = vrot.slane %v881, 1
      %v1002 = vsel %vm391, %v1000, %v1001
      %v1003 = vrot.slane %v882, 1
      %v1004 = vsel %vm391, %v1001, %v1003
      %v1005 = vrot.slane %v883, 1
      %v1006 = vrot.slane %v884, 1
      %v1007 = vsel %vm391, %v1005, %v1006
      %v1008 = vrot.slane %v885, 1
      %v1009 = vsel %vm391, %v1006, %v1008
      %v1010 = vrot.slane %v886, 1
      %v1011 = vrot.slane %v887, 1
      %v1012 = vsel %vm391, %v1010, %v1011
      %v1013 = vrot.slane %v888, 1
      %v1014 = vsel %vm391, %v1011, %v1013
      %v1015 = vrot.slane %v889, 1
      %v1016 = vrot.slane %v890, 1
      %v1017 = vsel %vm391, %v1015, %v1016
      %v1018 = vrot.slane %v891, 1
      %v1019 = vsel %vm391, %v1016, %v1018
      %v1052 = vadd.f32 %v811, %v942
      %v1053 = vadd.f32 %v812, %v944
      %v1054 = vadd.f32 %v813, %v947
      %v1055 = vadd.f32 %v814, %v949
      %v1056 = vadd.f32 %v815, %v952
      %v1057 = vadd.f32 %v816, %v954
      %v1058 = vadd.f32 %v817, %v957
      %v1059 = vadd.f32 %v818, %v959
      %v1060 = vadd.f32 %v819, %v962
      %v1061 = vadd.f32 %v820, %v964
      %v1062 = vadd.f32 %v821, %v967
      %v1063 = vadd.f32 %v822, %v969
      %v1064 = vadd.f32 %v823, %v972
      %v1065 = vadd.f32 %v824, %v974
      %v1066 = vadd.f32 %v825, %v977
      %v1067 = vadd.f32 %v826, %v979
      %v1068 = vadd.f32 %v827, %v982
      %v1069 = vadd.f32 %v828, %v984
      %v1070 = vadd.f32 %v829, %v987
      %v1071 = vadd.f32 %v830, %v989
      %v1072 = vadd.f32 %v831, %v992
      %v1073 = vadd.f32 %v832, %v994
      %v1074 = vadd.f32 %v833, %v997
      %v1075 = vadd.f32 %v834, %v999
      %v1076 = vadd.f32 %v835, %v1002
      %v1077 = vadd.f32 %v836, %v1004
      %v1078 = vadd.f32 %v837, %v1007
      %v1079 = vadd.f32 %v838, %v1009
      %v1080 = vadd.f32 %v839, %v1012
      %v1081 = vadd.f32 %v840, %v1014
      %v1082 = vadd.f32 %v841, %v1017
      %v1083 = vadd.f32 %v842, %v1019
      %v1084 = vperm.slane %v226, 2
      %v1085 = vmul.f32 %v174, %v1084
      %v1086 = vmul.f32 %v175, %v1084
      %v1087 = vmul.f32 %v176, %v1084
      %v1088 = vmul.f32 %v177, %v1084
      %v1089 = vmul.f32 %v178, %v1084
      %v1090 = vmul.f32 %v179, %v1084
      %v1091 = vmul.f32 %v180, %v1084
      %v1092 = vmul.f32 %v181, %v1084
      %v1093 = vmul.f32 %v182, %v1084
      %v1094 = vmul.f32 %v183, %v1084
      %v1095 = vmul.f32 %v184, %v1084
      %v1096 = vmul.f32 %v185, %v1084
      %v1097 = vmul.f32 %v186, %v1084
      %v1098 = vmul.f32 %v187, %v1084
      %v1099 = vmul.f32 %v188, %v1084
      %v1100 = vmul.f32 %v189, %v1084
      %v1101 = vmul.f32 %v190, %v1084
      %v1102 = vmul.f32 %v191, %v1084
      %v1103 = vmul.f32 %v192, %v1084
      %v1104 = vmul.f32 %v193, %v1084
      %v1105 = vmul.f32 %v194, %v1084
      %v1106 = vmul.f32 %v195, %v1084
      %v1107 = vmul.f32 %v196, %v1084
      %v1108 = vmul.f32 %v197, %v1084
      %v1109 = vmul.f32 %v198, %v1084
      %v1110 = vmul.f32 %v199, %v1084
      %v1111 = vmul.f32 %v200, %v1084
      %v1112 = vmul.f32 %v201, %v1084
      %v1113 = vmul.f32 %v202, %v1084
      %v1114 = vmul.f32 %v203, %v1084
      %v1115 = vmul.f32 %v204, %v1084
      %v1116 = vmul.f32 %v205, %v1084
      %v1117 = vmul.f32 %v206, %v1084
      %v1118 = vmul.f32 %v207, %v1084
      %v1119 = vmul.f32 %v208, %v1084
      %v1120 = vmul.f32 %v209, %v1084
      %v1121 = vmul.f32 %v210, %v1084
      %v1122 = vmul.f32 %v211, %v1084
      %v1123 = vmul.f32 %v212, %v1084
      %v1124 = vmul.f32 %v213, %v1084
      %v1125 = vmul.f32 %v214, %v1084
      %v1126 = vmul.f32 %v215, %v1084
      %v1127 = vmul.f32 %v216, %v1084
      %v1128 = vmul.f32 %v217, %v1084
      %v1129 = vmul.f32 %v218, %v1084
      %v1130 = vmul.f32 %v219, %v1084
      %v1131 = vmul.f32 %v220, %v1084
      %v1132 = vmul.f32 %v221, %v1084
      %v1181 = vrot.slane %v1085, 2
      %v1182 = vrot.slane %v1086, 2
      %v1183 = vsel %vm633, %v1181, %v1182
      %v1184 = vrot.slane %v1087, 2
      %v1185 = vsel %vm633, %v1182, %v1184
      %v1186 = vrot.slane %v1088, 2
      %v1187 = vrot.slane %v1089, 2
      %v1188 = vsel %vm633, %v1186, %v1187
      %v1189 = vrot.slane %v1090, 2
      %v1190 = vsel %vm633, %v1187, %v1189
      %v1191 = vrot.slane %v1091, 2
      %v1192 = vrot.slane %v1092, 2
      %v1193 = vsel %vm633, %v1191, %v1192
      %v1194 = vrot.slane %v1093, 2
      %v1195 = vsel %vm633, %v1192, %v1194
      %v1196 = vrot.slane %v1094, 2
      %v1197 = vrot.slane %v1095, 2
      %v1198 = vsel %vm633, %v1196, %v1197
      %v1199 = vrot.slane %v1096, 2
      %v1200 = vsel %vm633, %v1197, %v1199
      %v1201 = vrot.slane %v1097, 2
      %v1202 = vrot.slane %v1098, 2
      %v1203 = vsel %vm633, %v1201, %v1202
      %v1204 = vrot.slane %v1099, 2
      %v1205 = vsel %vm633, %v1202, %v1204
      %v1206 = vrot.slane %v1100, 2
      %v1207 = vrot.slane %v1101, 2
      %v1208 = vsel %vm633, %v1206, %v1207
      %v1209 = vrot.slane %v1102, 2
      %v1210 = vsel %vm633, %v1207, %v1209
      %v1211 = vrot.slane %v1103, 2
      %v1212 = vrot.slane %v1104, 2
      %v1213 = vsel %vm633, %v1211, %v1212
      %v1214 = vrot.slane %v1105, 2
      %v1215 = vsel %vm633, %v1212, %v1214
      %v1216 = vrot.slane %v1106, 2
      %v1217 = vrot.slane %v1107, 2
      %v1218 = vsel %vm633, %v1216, %v1217
      %v1219 = vrot.slane %v1108, 2
      %v1220 = vsel %vm633, %v1217, %v1219
      %v1221 = vrot.slane %v1109, 2
      %v1222 = vrot.slane %v1110, 2
      %v1223 = vsel %vm633, %v1221, %v1222
      %v1224 = vrot.slane %v1111, 2
      %v1225 = vsel %vm633, %v1222, %v1224
      %v1226 = vrot.slane %v1112, 2
      %v1227 = vrot.slane %v1113, 2
      %v1228 = vsel %vm633, %v1226, %v1227
      %v1229 = vrot.slane %v1114, 2
      %v1230 = vsel %vm633, %v1227, %v1229
      %v1231 = vrot.slane %v1115, 2
      %v1232 = vrot.slane %v1116, 2
      %v1233 = vsel %vm633, %v1231, %v1232
      %v1234 = vrot.slane %v1117, 2
      %v1235 = vsel %vm633, %v1232, %v1234
      %v1236 = vrot.slane %v1118, 2
      %v1237 = vrot.slane %v1119, 2
      %v1238 = vsel %vm633, %v1236, %v1237
      %v1239 = vrot.slane %v1120, 2
      %v1240 = vsel %vm633, %v1237, %v1239
      %v1241 = vrot.slane %v1121, 2
      %v1242 = vrot.slane %v1122, 2
      %v1243 = vsel %vm633, %v1241, %v1242
      %v1244 = vrot.slane %v1123, 2
      %v1245 = vsel %vm633, %v1242, %v1244
      %v1246 = vrot.slane %v1124, 2
      %v1247 = vrot.slane %v1125, 2
      %v1248 = vsel %vm633, %v1246, %v1247
      %v1249 = vrot.slane %v1126, 2
      %v1250 = vsel %vm633, %v1247, %v1249
      %v1251 = vrot.slane %v1127, 2
      %v1252 = vrot.slane %v1128, 2
      %v1253 = vsel %vm633, %v1251, %v1252
      %v1254 = vrot.slane %v1129, 2
      %v1255 = vsel %vm633, %v1252, %v1254
      %v1256 = vrot.slane %v1130, 2
      %v1257 = vrot.slane %v1131, 2
      %v1258 = vsel %vm633, %v1256, %v1257
      %v1259 = vrot.slane %v1132, 2
      %v1260 = vsel %vm633, %v1257, %v1259
      %v1293 = vadd.f32 %v1052, %v1183
      %v1294 = vadd.f32 %v1053, %v1185
      %v1295 = vadd.f32 %v1054, %v1188
      %v1296 = vadd.f32 %v1055, %v1190
      %v1297 = vadd.f32 %v1056, %v1193
      %v1298 = vadd.f32 %v1057, %v1195
      %v1299 = vadd.f32 %v1058, %v1198
      %v1300 = vadd.f32 %v1059, %v1200
      %v1301 = vadd.f32 %v1060, %v1203
      %v1302 = vadd.f32 %v1061, %v1205
      %v1303 = vadd.f32 %v1062, %v1208
      %v1304 = vadd.f32 %v1063, %v1210
      %v1305 = vadd.f32 %v1064, %v1213
      %v1306 = vadd.f32 %v1065, %v1215
      %v1307 = vadd.f32 %v1066, %v1218
      %v1308 = vadd.f32 %v1067, %v1220
      %v1309 = vadd.f32 %v1068, %v1223
      %v1310 = vadd.f32 %v1069, %v1225
      %v1311 = vadd.f32 %v1070, %v1228
      %v1312 = vadd.f32 %v1071, %v1230
      %v1313 = vadd.f32 %v1072, %v1233
      %v1314 = vadd.f32 %v1073, %v1235
      %v1315 = vadd.f32 %v1074, %v1238
      %v1316 = vadd.f32 %v1075, %v1240
      %v1317 = vadd.f32 %v1076, %v1243
      %v1318 = vadd.f32 %v1077, %v1245
      %v1319 = vadd.f32 %v1078, %v1248
      %v1320 = vadd.f32 %v1079, %v1250
      %v1321 = vadd.f32 %v1080, %v1253
      %v1322 = vadd.f32 %v1081, %v1255
      %v1323 = vadd.f32 %v1082, %v1258
      %v1324 = vadd.f32 %v1083, %v1260
      %v1325 = vperm.slane %v227, 0
      %v1326 = vmul.f32 %v177, %v1325
      %v1327 = vmul.f32 %v178, %v1325
      %v1328 = vmul.f32 %v180, %v1325
      %v1329 = vmul.f32 %v181, %v1325
      %v1330 = vmul.f32 %v183, %v1325
      %v1331 = vmul.f32 %v184, %v1325
      %v1332 = vmul.f32 %v186, %v1325
      %v1333 = vmul.f32 %v187, %v1325
      %v1334 = vmul.f32 %v189, %v1325
      %v1335 = vmul.f32 %v190, %v1325
      %v1336 = vmul.f32 %v192, %v1325
      %v1337 = vmul.f32 %v193, %v1325
      %v1338 = vmul.f32 %v195, %v1325
      %v1339 = vmul.f32 %v196, %v1325
      %v1340 = vmul.f32 %v198, %v1325
      %v1341 = vmul.f32 %v199, %v1325
      %v1342 = vmul.f32 %v201, %v1325
      %v1343 = vmul.f32 %v202, %v1325
      %v1344 = vmul.f32 %v204, %v1325
      %v1345 = vmul.f32 %v205, %v1325
      %v1346 = vmul.f32 %v207, %v1325
      %v1347 = vmul.f32 %v208, %v1325
      %v1348 = vmul.f32 %v210, %v1325
      %v1349 = vmul.f32 %v211, %v1325
      %v1350 = vmul.f32 %v213, %v1325
      %v1351 = vmul.f32 %v214, %v1325
      %v1352 = vmul.f32 %v216, %v1325
      %v1353 = vmul.f32 %v217, %v1325
      %v1354 = vmul.f32 %v219, %v1325
      %v1355 = vmul.f32 %v220, %v1325
      %v1356 = vmul.f32 %v222, %v1325
      %v1357 = vmul.f32 %v223, %v1325
      %v1358 = vadd.f32 %v1293, %v1326
      %v1359 = vadd.f32 %v1294, %v1327
      %v1360 = vadd.f32 %v1295, %v1328
      %v1361 = vadd.f32 %v1296, %v1329
      %v1362 = vadd.f32 %v1297, %v1330
      %v1363 = vadd.f32 %v1298, %v1331
      %v1364 = vadd.f32 %v1299, %v1332
      %v1365 = vadd.f32 %v1300, %v1333
      %v1366 = vadd.f32 %v1301, %v1334
      %v1367 = vadd.f32 %v1302, %v1335
      %v1368 = vadd.f32 %v1303, %v1336
      %v1369 = vadd.f32 %v1304, %v1337
      %v1370 = vadd.f32 %v1305, %v1338
      %v1371 = vadd.f32 %v1306, %v1339
      %v1372 = vadd.f32 %v1307, %v1340
      %v1373 = vadd.f32 %v1308, %v1341
      %v1374 = vadd.f32 %v1309, %v1342
      %v1375 = vadd.f32 %v1310, %v1343
      %v1376 = vadd.f32 %v1311, %v1344
      %v1377 = vadd.f32 %v1312, %v1345
      %v1378 = vadd.f32 %v1313, %v1346
      %v1379 = vadd.f32 %v1314, %v1347
      %v1380 = vadd.f32 %v1315, %v1348
      %v1381 = vadd.f32 %v1316, %v1349
      %v1382 = vadd.f32 %v1317, %v1350
      %v1383 = vadd.f32 %v1318, %v1351
      %v1384 = vadd.f32 %v1319, %v1352
      %v1385 = vadd.f32 %v1320, %v1353
      %v1386 = vadd.f32 %v1321, %v1354
      %v1387 = vadd.f32 %v1322, %v1355
      %v1388 = vadd.f32 %v1323, %v1356
      %v1389 = vadd.f32 %v1324, %v1357
      %v1390 = vperm.slane %v227, 1
      %v1391 = vmul.f32 %v177, %v1390
      %v1392 = vmul.f32 %v178, %v1390
      %v1393 = vmul.f32 %v179, %v1390
      %v1394 = vmul.f32 %v180, %v1390
      %v1395 = vmul.f32 %v181, %v1390
      %v1396 = vmul.f32 %v182, %v1390
      %v1397 = vmul.f32 %v183, %v1390
      %v1398 = vmul.f32 %v184, %v1390
      %v1399 = vmul.f32 %v185, %v1390
      %v1400 = vmul.f32 %v186, %v1390
      %v1401 = vmul.f32 %v187, %v1390
      %v1402 = vmul.f32 %v188, %v1390
      %v1403 = vmul.f32 %v189, %v1390
      %v1404 = vmul.f32 %v190, %v1390
      %v1405 = vmul.f32 %v191, %v1390
      %v1406 = vmul.f32 %v192, %v1390
      %v1407 = vmul.f32 %v193, %v1390
      %v1408 = vmul.f32 %v194, %v1390
      %v1409 = vmul.f32 %v195, %v1390
      %v1410 = vmul.f32 %v196, %v1390
      %v1411 = vmul.f32 %v197, %v1390
      %v1412 = vmul.f32 %v198, %v1390
      %v1413 = vmul.f32 %v199, %v1390
      %v1414 = vmul.f32 %v200, %v1390
      %v1415 = vmul.f32 %v201, %v1390
      %v1416 = vmul.f32 %v202, %v1390
      %v1417 = vmul.f32 %v203, %v1390
      %v1418 = vmul.f32 %v204, %v1390
      %v1419 = vmul.f32 %v205, %v1390
      %v1420 = vmul.f32 %v206, %v1390
      %v1421 = vmul.f32 %v207, %v1390
      %v1422 = vmul.f32 %v208, %v1390
      %v1423 = vmul.f32 %v209, %v1390
      %v1424 = vmul.f32 %v210, %v1390
      %v1425 = vmul.f32 %v211, %v1390
      %v1426 = vmul.f32 %v212, %v1390
      %v1427 = vmul.f32 %v213, %v1390
      %v1428 = vmul.f32 %v214, %v1390
      %v1429 = vmul.f32 %v215, %v1390
      %v1430 = vmul.f32 %v216, %v1390
      %v1431 = vmul.f32 %v217, %v1390
      %v1432 = vmul.f32 %v218, %v1390
      %v1433 = vmul.f32 %v219, %v1390
      %v1434 = vmul.f32 %v220, %v1390
      %v1435 = vmul.f32 %v221, %v1390
      %v1436 = vmul.f32 %v222, %v1390
      %v1437 = vmul.f32 %v223, %v1390
      %v1438 = vmul.f32 %v224, %v1390
      %v1487 = vrot.slane %v1391, 1
      %v1488 = vrot.slane %v1392, 1
      %v1489 = vsel %vm391, %v1487, %v1488
      %v1490 = vrot.slane %v1393, 1
      %v1491 = vsel %vm391, %v1488, %v1490
      %v1492 = vrot.slane %v1394, 1
      %v1493 = vrot.slane %v1395, 1
      %v1494 = vsel %vm391, %v1492, %v1493
      %v1495 = vrot.slane %v1396, 1
      %v1496 = vsel %vm391, %v1493, %v1495
      %v1497 = vrot.slane %v1397, 1
      %v1498 = vrot.slane %v1398, 1
      %v1499 = vsel %vm391, %v1497, %v1498
      %v1500 = vrot.slane %v1399, 1
      %v1501 = vsel %vm391, %v1498, %v1500
      %v1502 = vrot.slane %v1400, 1
      %v1503 = vrot.slane %v1401, 1
      %v1504 = vsel %vm391, %v1502, %v1503
      %v1505 = vrot.slane %v1402, 1
      %v1506 = vsel %vm391, %v1503, %v1505
      %v1507 = vrot.slane %v1403, 1
      %v1508 = vrot.slane %v1404, 1
      %v1509 = vsel %vm391, %v1507, %v1508
      %v1510 = vrot.slane %v1405, 1
      %v1511 = vsel %vm391, %v1508, %v1510
      %v1512 = vrot.slane %v1406, 1
      %v1513 = vrot.slane %v1407, 1
      %v1514 = vsel %vm391, %v1512, %v1513
      %v1515 = vrot.slane %v1408, 1
      %v1516 = vsel %vm391, %v1513, %v1515
      %v1517 = vrot.slane %v1409, 1
      %v1518 = vrot.slane %v1410, 1
      %v1519 = vsel %vm391, %v1517, %v1518
      %v1520 = vrot.slane %v1411, 1
      %v1521 = vsel %vm391, %v1518, %v1520
      %v1522 = vrot.slane %v1412, 1
      %v1523 = vrot.slane %v1413, 1
      %v1524 = vsel %vm391, %v1522, %v1523
      %v1525 = vrot.slane %v1414, 1
      %v1526 = vsel %vm391, %v1523, %v1525
      %v1527 = vrot.slane %v1415, 1
      %v1528 = vrot.slane %v1416, 1
      %v1529 = vsel %vm391, %v1527, %v1528
      %v1530 = vrot.slane %v1417, 1
      %v1531 = vsel %vm391, %v1528, %v1530
      %v1532 = vrot.slane %v1418, 1
      %v1533 = vrot.slane %v1419, 1
      %v1534 = vsel %vm391, %v1532, %v1533
      %v1535 = vrot.slane %v1420, 1
      %v1536 = vsel %vm391, %v1533, %v1535
      %v1537 = vrot.slane %v1421, 1
      %v1538 = vrot.slane %v1422, 1
      %v1539 = vsel %vm391, %v1537, %v1538
      %v1540 = vrot.slane %v1423, 1
      %v1541 = vsel %vm391, %v1538, %v1540
      %v1542 = vrot.slane %v1424, 1
      %v1543 = vrot.slane %v1425, 1
      %v1544 = vsel %vm391, %v1542, %v1543
      %v1545 = vrot.slane %v1426, 1
      %v1546 = vsel %vm391, %v1543, %v1545
      %v1547 = vrot.slane %v1427, 1
      %v1548 = vrot.slane %v1428, 1
      %v1549 = vsel %vm391, %v1547, %v1548
      %v1550 = vrot.slane %v1429, 1
      %v1551 = vsel %vm391, %v1548, %v1550
      %v1552 = vrot.slane %v1430, 1
      %v1553 = vrot.slane %v1431, 1
      %v1554 = vsel %vm391, %v1552, %v1553
      %v1555 = vrot.slane %v1432, 1
      %v1556 = vsel %vm391, %v1553, %v1555
      %v1557 = vrot.slane %v1433, 1
      %v1558 = vrot.slane %v1434, 1
      %v1559 = vsel %vm391, %v1557, %v1558
      %v1560 = vrot.slane %v1435, 1
      %v1561 = vsel %vm391, %v1558, %v1560
      %v1562 = vrot.slane %v1436, 1
      %v1563 = vrot.slane %v1437, 1
      %v1564 = vsel %vm391, %v1562, %v1563
      %v1565 = vrot.slane %v1438, 1
      %v1566 = vsel %vm391, %v1563, %v1565
      %v1599 = vadd.f32 %v1358, %v1489
      %v1600 = vadd.f32 %v1359, %v1491
      %v1601 = vadd.f32 %v1360, %v1494
      %v1602 = vadd.f32 %v1361, %v1496
      %v1603 = vadd.f32 %v1362, %v1499
      %v1604 = vadd.f32 %v1363, %v1501
      %v1605 = vadd.f32 %v1364, %v1504
      %v1606 = vadd.f32 %v1365, %v1506
      %v1607 = vadd.f32 %v1366, %v1509
      %v1608 = vadd.f32 %v1367, %v1511
      %v1609 = vadd.f32 %v1368, %v1514
      %v1610 = vadd.f32 %v1369, %v1516
      %v1611 = vadd.f32 %v1370, %v1519
      %v1612 = vadd.f32 %v1371, %v1521
      %v1613 = vadd.f32 %v1372, %v1524
      %v1614 = vadd.f32 %v1373, %v1526
      %v1615 = vadd.f32 %v1374, %v1529
      %v1616 = vadd.f32 %v1375, %v1531
      %v1617 = vadd.f32 %v1376, %v1534
      %v1618 = vadd.f32 %v1377, %v1536
      %v1619 = vadd.f32 %v1378, %v1539
      %v1620 = vadd.f32 %v1379, %v1541
      %v1621 = vadd.f32 %v1380, %v1544
      %v1622 = vadd.f32 %v1381, %v1546
      %v1623 = vadd.f32 %v1382, %v1549
      %v1624 = vadd.f32 %v1383, %v1551
      %v1625 = vadd.f32 %v1384, %v1554
      %v1626 = vadd.f32 %v1385, %v1556
      %v1627 = vadd.f32 %v1386, %v1559
      %v1628 = vadd.f32 %v1387, %v1561
      %v1629 = vadd.f32 %v1388, %v1564
      %v1630 = vadd.f32 %v1389, %v1566
      %v1631 = vperm.slane %v227, 2
      %v1632 = vmul.f32 %v177, %v1631
      %v1633 = vmul.f32 %v178, %v1631
      %v1634 = vmul.f32 %v179, %v1631
      %v1635 = vmul.f32 %v180, %v1631
      %v1636 = vmul.f32 %v181, %v1631
      %v1637 = vmul.f32 %v182, %v1631
      %v1638 = vmul.f32 %v183, %v1631
      %v1639 = vmul.f32 %v184, %v1631
      %v1640 = vmul.f32 %v185, %v1631
      %v1641 = vmul.f32 %v186, %v1631
      %v1642 = vmul.f32 %v187, %v1631
      %v1643 = vmul.f32 %v188, %v1631
      %v1644 = vmul.f32 %v189, %v1631
      %v1645 = vmul.f32 %v190, %v1631
      %v1646 = vmul.f32 %v191, %v1631
      %v1647 = vmul.f32 %v192, %v1631
      %v1648 = vmul.f32 %v193, %v1631
      %v1649 = vmul.f32 %v194, %v1631
      %v1650 = vmul.f32 %v195, %v1631
      %v1651 = vmul.f32 %v196, %v1631
      %v1652 = vmul.f32 %v197, %v1631
      %v1653 = vmul.f32 %v198, %v1631
      %v1654 = vmul.f32 %v199, %v1631
      %v1655 = vmul.f32 %v200, %v1631
      %v1656 = vmul.f32 %v201, %v1631
      %v1657 = vmul.f32 %v202, %v1631
      %v1658 = vmul.f32 %v203, %v1631
      %v1659 = vmul.f32 %v204, %v1631
      %v1660 = vmul.f32 %v205, %v1631
      %v1661 = vmul.f32 %v206, %v1631
      %v1662 = vmul.f32 %v207, %v1631
      %v1663 = vmul.f32 %v208, %v1631
      %v1664 = vmul.f32 %v209, %v1631
      %v1665 = vmul.f32 %v210, %v1631
      %v1666 = vmul.f32 %v211, %v1631
      %v1667 = vmul.f32 %v212, %v1631
      %v1668 = vmul.f32 %v213, %v1631
      %v1669 = vmul.f32 %v214, %v1631
      %v1670 = vmul.f32 %v215, %v1631
      %v1671 = vmul.f32 %v216, %v1631
      %v1672 = vmul.f32 %v217, %v1631
      %v1673 = vmul.f32 %v218, %v1631
      %v1674 = vmul.f32 %v219, %v1631
      %v1675 = vmul.f32 %v220, %v1631
      %v1676 = vmul.f32 %v221, %v1631
      %v1677 = vmul.f32 %v222, %v1631
      %v1678 = vmul.f32 %v223, %v1631
      %v1679 = vmul.f32 %v224, %v1631
      %v1728 = vrot.slane %v1632, 2
      %v1729 = vrot.slane %v1633, 2
      %v1730 = vsel %vm633, %v1728, %v1729
      %v1731 = vrot.slane %v1634, 2
      %v1732 = vsel %vm633, %v1729, %v1731
      %v1733 = vrot.slane %v1635, 2
      %v1734 = vrot.slane %v1636, 2
      %v1735 = vsel %vm633, %v1733, %v1734
      %v1736 = vrot.slane %v1637, 2
      %v1737 = vsel %vm633, %v1734, %v1736
      %v1738 = vrot.slane %v1638, 2
      %v1739 = vrot.slane %v1639, 2
      %v1740 = vsel %vm633, %v1738, %v1739
      %v1741 = vrot.slane %v1640, 2
      %v1742 = vsel %vm633, %v1739, %v1741
      %v1743 = vrot.slane %v1641, 2
      %v1744 = vrot.slane %v1642, 2
      %v1745 = vsel %vm633, %v1743, %v1744
      %v1746 = vrot.slane %v1643, 2
      %v1747 = vsel %vm633, %v1744, %v1746
      %v1748 = vrot.slane %v1644, 2
      %v1749 = vrot.slane %v1645, 2
      %v1750 = vsel %vm633, %v1748, %v1749
      %v1751 = vrot.slane %v1646, 2
      %v1752 = vsel %vm633, %v1749, %v1751
      %v1753 = vrot.slane %v1647, 2
      %v1754 = vrot.slane %v1648, 2
      %v1755 = vsel %vm633, %v1753, %v1754
      %v1756 = vrot.slane %v1649, 2
      %v1757 = vsel %vm633, %v1754, %v1756
      %v1758 = vrot.slane %v1650, 2
      %v1759 = vrot.slane %v1651, 2
      %v1760 = vsel %vm633, %v1758, %v1759
      %v1761 = vrot.slane %v1652, 2
      %v1762 = vsel %vm633, %v1759, %v1761
      %v1763 = vrot.slane %v1653, 2
      %v1764 = vrot.slane %v1654, 2
      %v1765 = vsel %vm633, %v1763, %v1764
      %v1766 = vrot.slane %v1655, 2
      %v1767 = vsel %vm633, %v1764, %v1766
      %v1768 = vrot.slane %v1656, 2
      %v1769 = vrot.slane %v1657, 2
      %v1770 = vsel %vm633, %v1768, %v1769
      %v1771 = vrot.slane %v1658, 2
      %v1772 = vsel %vm633, %v1769, %v1771
      %v1773 = vrot.slane %v1659, 2
      %v1774 = vrot.slane %v1660, 2
      %v1775 = vsel %vm633, %v1773, %v1774
      %v1776 = vrot.slane %v1661, 2
      %v1777 = vsel %vm633, %v1774, %v1776
      %v1778 = vrot.slane %v1662, 2
      %v1779 = vrot.slane %v1663, 2
      %v1780 = vsel %vm633, %v1778, %v1779
      %v1781 = vrot.slane %v1664, 2
      %v1782 = vsel %vm633, %v1779, %v1781
      %v1783 = vrot.slane %v1665, 2
      %v1784 = vrot.slane %v1666, 2
      %v1785 = vsel %vm633, %v1783, %v1784
      %v1786 = vrot.slane %v1667, 2
      %v1787 = vsel %vm633, %v1784, %v1786
      %v1788 = vrot.slane %v1668, 2
      %v1789 = vrot.slane %v1669, 2
      %v1790 = vsel %vm633, %v1788, %v1789
      %v1791 = vrot.slane %v1670, 2
      %v1792 = vsel %vm633, %v1789, %v1791
      %v1793 = vrot.slane %v1671, 2
      %v1794 = vrot.slane %v1672, 2
      %v1795 = vsel %vm633, %v1793, %v1794
      %v1796 = vrot.slane %v1673, 2
      %v1797 = vsel %vm633, %v1794, %v1796
      %v1798 = vrot.slane %v1674, 2
      %v1799 = vrot.slane %v1675, 2
      %v1800 = vsel %vm633, %v1798, %v1799
      %v1801 = vrot.slane %v1676, 2
      %v1802 = vsel %vm633, %v1799, %v1801
      %v1803 = vrot.slane %v1677, 2
      %v1804 = vrot.slane %v1678, 2
      %v1805 = vsel %vm633, %v1803, %v1804
      %v1806 = vrot.slane %v1679, 2
      %v1807 = vsel %vm633, %v1804, %v1806
      %v1840 = vadd.f32 %v1599, %v1730
      %v1841 = vadd.f32 %v1600, %v1732
      %v1842 = vadd.f32 %v1601, %v1735
      %v1843 = vadd.f32 %v1602, %v1737
      %v1844 = vadd.f32 %v1603, %v1740
      %v1845 = vadd.f32 %v1604, %v1742
      %v1846 = vadd.f32 %v1605, %v1745
      %v1847 = vadd.f32 %v1606, %v1747
      %v1848 = vadd.f32 %v1607, %v1750
      %v1849 = vadd.f32 %v1608, %v1752
      %v1850 = vadd.f32 %v1609, %v1755
      %v1851 = vadd.f32 %v1610, %v1757
      %v1852 = vadd.f32 %v1611, %v1760
      %v1853 = vadd.f32 %v1612, %v1762
      %v1854 = vadd.f32 %v1613, %v1765
      %v1855 = vadd.f32 %v1614, %v1767
      %v1856 = vadd.f32 %v1615, %v1770
      %v1857 = vadd.f32 %v1616, %v1772
      %v1858 = vadd.f32 %v1617, %v1775
      %v1859 = vadd.f32 %v1618, %v1777
      %v1860 = vadd.f32 %v1619, %v1780
      %v1861 = vadd.f32 %v1620, %v1782
      %v1862 = vadd.f32 %v1621, %v1785
      %v1863 = vadd.f32 %v1622, %v1787
      %v1864 = vadd.f32 %v1623, %v1790
      %v1865 = vadd.f32 %v1624, %v1792
      %v1866 = vadd.f32 %v1625, %v1795
      %v1867 = vadd.f32 %v1626, %v1797
      %v1868 = vadd.f32 %v1627, %v1800
      %v1869 = vadd.f32 %v1628, %v1802
      %v1870 = vadd.f32 %v1629, %v1805
      %v1871 = vadd.f32 %v1630, %v1807
      %vm1872 = vcmask 31744
      %v1874 = vsel %vm1872, %v1840, 0
      %v1877 = vsel %vm1872, %v1841, 0
      %v1880 = vsel %vm1872, %v1842, 0
      %v1883 = vsel %vm1872, %v1843, 0
      %v1886 = vsel %vm1872, %v1844, 0
      %v1889 = vsel %vm1872, %v1845, 0
      %v1892 = vsel %vm1872, %v1846, 0
      %v1895 = vsel %vm1872, %v1847, 0
      %v1898 = vsel %vm1872, %v1848, 0
      %v1901 = vsel %vm1872, %v1849, 0
      %v1904 = vsel %vm1872, %v1850, 0
      %v1907 = vsel %vm1872, %v1851, 0
      %v1910 = vsel %vm1872, %v1852, 0
      %v1913 = vsel %vm1872, %v1853, 0
      %v1916 = vsel %vm1872, %v1854, 0
      %v1919 = vsel %vm1872, %v1855, 0
      %v1922 = vsel %vm1872, %v1856, 0
      %v1925 = vsel %vm1872, %v1857, 0
      %v1928 = vsel %vm1872, %v1858, 0
      %v1931 = vsel %vm1872, %v1859, 0
      %v1934 = vsel %vm1872, %v1860, 0
      %v1937 = vsel %vm1872, %v1861, 0
      %v1940 = vsel %vm1872, %v1862, 0
      %v1943 = vsel %vm1872, %v1863, 0
      %v1946 = vsel %vm1872, %v1864, 0
      %v1949 = vsel %vm1872, %v1865, 0
      %v1952 = vsel %vm1872, %v1866, 0
      %v1955 = vsel %vm1872, %v1867, 0
      %v1958 = vsel %vm1872, %v1868, 0
      %v1961 = vsel %vm1872, %v1869, 0
      %v1964 = vsel %vm1872, %v1870, 0
      %v1967 = vsel %vm1872, %v1871, 0
      %vm1969 = vcmask 1043456
      %v1971 = vsel %vm1969, %v228, 0
      %1973 = vmatpush.msra.mxu0 0.0
      %1974 = vmatpush.msra.mxu0 0.0
      %1975 = vmatpush.msra.mxu0 0.0
      %1976 = vmatpush.msra.mxu0 0.0
      %1977 = vmatpush.msra.mxu0 0.0
      %1978 = vmatpush.msra.mxu0 0.0
      %1979 = vmatpush.msra.mxu0 0.0
      %1980 = vmatpush.msra.mxu0 0.0
      %1981 = vmatpush.msra.mxu0 0.0
      %1982 = vmatpush.msra.mxu0 0.0
      %1983 = vmatpush.msra.mxu0 0.0
      %1984 = vmatpush.msra.mxu0 0.0
      %1985 = vmatpush.msra.mxu0 0.0
      %1986 = vmatpush.msra.mxu0 0.0
      %1987 = vmatpush.msra.mxu0 0.0
      %1988 = vmatpush.msra.mxu0 %v1971
      %1989 = vmatmul.f32.gmra.mxu0 %v1874
      %v1990 = vpop.f32.mrf.mxu0
      %v1991 = vadd.f32 0.0, %v1990
      %1992 = vmatmul.f32.gmra.mxu0 %v1877
      %v1993 = vpop.f32.mrf.mxu0
      %v1994 = vadd.f32 0.0, %v1993
      %1995 = vmatmul.f32.gmra.mxu0 %v1880
      %v1996 = vpop.f32.mrf.mxu0
      %v1997 = vadd.f32 0.0, %v1996
      %1998 = vmatmul.f32.gmra.mxu0 %v1883
      %v1999 = vpop.f32.mrf.mxu0
      %v2000 = vadd.f32 0.0, %v1999
      %2001 = vmatmul.f32.gmra.mxu0 %v1886
      %v2002 = vpop.f32.mrf.mxu0
      %v2003 = vadd.f32 0.0, %v2002
      %2004 = vmatmul.f32.gmra.mxu0 %v1889
      %v2005 = vpop.f32.mrf.mxu0
      %v2006 = vadd.f32 0.0, %v2005
      %2007 = vmatmul.f32.gmra.mxu0 %v1892
      %v2008 = vpop.f32.mrf.mxu0
      %v2009 = vadd.f32 0.0, %v2008
      %2010 = vmatmul.f32.gmra.mxu0 %v1895
      %v2011 = vpop.f32.mrf.mxu0
      %v2012 = vadd.f32 0.0, %v2011
      %2013 = vmatmul.f32.gmra.mxu0 %v1898
      %v2014 = vpop.f32.mrf.mxu0
      %v2015 = vadd.f32 0.0, %v2014
      %2016 = vmatmul.f32.gmra.mxu0 %v1901
      %v2017 = vpop.f32.mrf.mxu0
      %v2018 = vadd.f32 0.0, %v2017
      %2019 = vmatmul.f32.gmra.mxu0 %v1904
      %v2020 = vpop.f32.mrf.mxu0
      %v2021 = vadd.f32 0.0, %v2020
      %2022 = vmatmul.f32.gmra.mxu0 %v1907
      %v2023 = vpop.f32.mrf.mxu0
      %v2024 = vadd.f32 0.0, %v2023
      %2025 = vmatmul.f32.gmra.mxu0 %v1910
      %v2026 = vpop.f32.mrf.mxu0
      %v2027 = vadd.f32 0.0, %v2026
      %2028 = vmatmul.f32.gmra.mxu0 %v1913
      %v2029 = vpop.f32.mrf.mxu0
      %v2030 = vadd.f32 0.0, %v2029
      %2031 = vmatmul.f32.gmra.mxu0 %v1916
      %v2032 = vpop.f32.mrf.mxu0
      %v2033 = vadd.f32 0.0, %v2032
      %2034 = vmatmul.f32.gmra.mxu0 %v1919
      %v2035 = vpop.f32.mrf.mxu0
      %v2036 = vadd.f32 0.0, %v2035
      %2037 = vmatmul.f32.gmra.mxu0 %v1922
      %v2038 = vpop.f32.mrf.mxu0
      %v2039 = vadd.f32 0.0, %v2038
      %2040 = vmatmul.f32.gmra.mxu0 %v1925
      %v2041 = vpop.f32.mrf.mxu0
      %v2042 = vadd.f32 0.0, %v2041
      %2043 = vmatmul.f32.gmra.mxu0 %v1928
      %v2044 = vpop.f32.mrf.mxu0
      %v2045 = vadd.f32 0.0, %v2044
      %2046 = vmatmul.f32.gmra.mxu0 %v1931
      %v2047 = vpop.f32.mrf.mxu0
      %v2048 = vadd.f32 0.0, %v2047
      %2049 = vmatmul.f32.gmra.mxu0 %v1934
      %v2050 = vpop.f32.mrf.mxu0
      %v2051 = vadd.f32 0.0, %v2050
      %2052 = vmatmul.f32.gmra.mxu0 %v1937
      %v2053 = vpop.f32.mrf.mxu0
      %v2054 = vadd.f32 0.0, %v2053
      %2055 = vmatmul.f32.gmra.mxu0 %v1940
      %v2056 = vpop.f32.mrf.mxu0
      %v2057 = vadd.f32 0.0, %v2056
      %2058 = vmatmul.f32.gmra.mxu0 %v1943
      %v2059 = vpop.f32.mrf.mxu0
      %v2060 = vadd.f32 0.0, %v2059
      %2061 = vmatmul.f32.gmra.mxu0 %v1946
      %v2062 = vpop.f32.mrf.mxu0
      %v2063 = vadd.f32 0.0, %v2062
      %2064 = vmatmul.f32.gmra.mxu0 %v1949
      %v2065 = vpop.f32.mrf.mxu0
      %v2066 = vadd.f32 0.0, %v2065
      %2067 = vmatmul.f32.gmra.mxu0 %v1952
      %v2068 = vpop.f32.mrf.mxu0
      %v2069 = vadd.f32 0.0, %v2068
      %2070 = vmatmul.f32.gmra.mxu0 %v1955
      %v2071 = vpop.f32.mrf.mxu0
      %v2072 = vadd.f32 0.0, %v2071
      %2073 = vmatmul.f32.gmra.mxu0 %v1958
      %v2074 = vpop.f32.mrf.mxu0
      %v2075 = vadd.f32 0.0, %v2074
      %2076 = vmatmul.f32.gmra.mxu0 %v1961
      %v2077 = vpop.f32.mrf.mxu0
      %v2078 = vadd.f32 0.0, %v2077
      %2079 = vmatmul.f32.gmra.mxu0 %v1964
      %v2080 = vpop.f32.mrf.mxu0
      %v2081 = vadd.f32 0.0, %v2080
      %2082 = vmatmul.f32.gmra.mxu0 %v1967
      %v2083 = vpop.f32.mrf.mxu0
      %v2084 = vadd.f32 0.0, %v2083
      %2085 = vdwg.mxu0
      %vm2086 = vcmask 64512
      %2087 = vst.msk [vmem:[%s170] sm:$0xff] %vm2086, %v1991
      %2088 = vst.msk [vmem:[%s170 + $0x8] sm:$0xff] %vm2086, %v1994
      %2089 = vst.msk [vmem:[%s170 + $0x10] sm:$0xff] %vm2086, %v1997
      %2090 = vst.msk [vmem:[%s170 + $0x18] sm:$0xff] %vm2086, %v2000
      %2091 = vst.msk [vmem:[%s170 + $0x20] sm:$0xff] %vm2086, %v2003
      %2092 = vst.msk [vmem:[%s170 + $0x28] sm:$0xff] %vm2086, %v2006
      %2093 = vst.msk [vmem:[%s170 + $0x30] sm:$0xff] %vm2086, %v2009
      %2094 = vst.msk [vmem:[%s170 + $0x38] sm:$0xff] %vm2086, %v2012
      %2095 = vst.msk [vmem:[%s170 + $0x40] sm:$0xff] %vm2086, %v2015
      %2096 = vst.msk [vmem:[%s170 + $0x48] sm:$0xff] %vm2086, %v2018
      %2097 = vst.msk [vmem:[%s170 + $0x50] sm:$0xff] %vm2086, %v2021
      %2098 = vst.msk [vmem:[%s170 + $0x58] sm:$0xff] %vm2086, %v2024
      %2099 = vst.msk [vmem:[%s170 + $0x60] sm:$0xff] %vm2086, %v2027
      %2100 = vst.msk [vmem:[%s170 + $0x68] sm:$0xff] %vm2086, %v2030
      %2101 = vst.msk [vmem:[%s170 + $0x70] sm:$0xff] %vm2086, %v2033
      %2102 = vst.msk [vmem:[%s170 + $0x78] sm:$0xff] %vm2086, %v2036
      %2103 = vst.msk [vmem:[%s170 + $0x80] sm:$0xff] %vm2086, %v2039
      %2104 = vst.msk [vmem:[%s170 + $0x88] sm:$0xff] %vm2086, %v2042
      %2105 = vst.msk [vmem:[%s170 + $0x90] sm:$0xff] %vm2086, %v2045
      %2106 = vst.msk [vmem:[%s170 + $0x98] sm:$0xff] %vm2086, %v2048
      %2107 = vst.msk [vmem:[%s170 + $0xa0] sm:$0xff] %vm2086, %v2051
      %2108 = vst.msk [vmem:[%s170 + $0xa8] sm:$0xff] %vm2086, %v2054
      %2109 = vst.msk [vmem:[%s170 + $0xb0] sm:$0xff] %vm2086, %v2057
      %2110 = vst.msk [vmem:[%s170 + $0xb8] sm:$0xff] %vm2086, %v2060
      %2111 = vst.msk [vmem:[%s170 + $0xc0] sm:$0xff] %vm2086, %v2063
      %2112 = vst.msk [vmem:[%s170 + $0xc8] sm:$0xff] %vm2086, %v2066
      %2113 = vst.msk [vmem:[%s170 + $0xd0] sm:$0xff] %vm2086, %v2069
      %2114 = vst.msk [vmem:[%s170 + $0xd8] sm:$0xff] %vm2086, %v2072
      %2115 = vst.msk [vmem:[%s170 + $0xe0] sm:$0xff] %vm2086, %v2075
      %2116 = vst.msk [vmem:[%s170 + $0xe8] sm:$0xff] %vm2086, %v2078
      %2117 = vst.msk [vmem:[%s170 + $0xf0] sm:$0xff] %vm2086, %v2081
      %2118 = vst.msk [vmem:[%s170 + $0xf8] sm:$0xff] %vm2086, %v2084
      %p2119 = scmp.lt.s32.totalorder %s14, 1
      %s2120 = scalar_select %p2119, %s14, 1
      %s2121 = smul.addr %s2120, 32
      %s2122 = smul.addr %s2121, 8
      %s2123 = scalar_lea.vmem %s3, %s2122
      // Predicated region
      $region33: #{tpu_custom_call.1} parent=31 // pred_check
        %p2124 = pneg %p100
      $region34: #{tpu_custom_call.1} parent=31 // pred_check_branch
        %2126 = sbr.rel (%p2124) target = $region36
      $region35: #{tpu_custom_call.1} parent=31 // pred_region
        _
      $region36: #{tpu_custom_call.1} parent=31 // pred_fallthru
        _
    $region32: #{tpu_custom_call.1} parent=5 // pred_fallthru
      _
    %p2127 = scmp.le.s32.totalorder 2, %s9
    // Predicated region
    $region37: #{tpu_custom_call.1} parent=5 // pred_check
      %p2128 = pneg %p2127
    $region38: #{tpu_custom_call.1} parent=5 // pred_check_branch
      %2130 = sbr.rel (%p2128) target = $region40
    $region39: #{tpu_custom_call.1} parent=5 // pred_region
      %s2131 = ssub.s32 %s9, 2
      // Predicated region
      $region41: #{tpu_custom_call.1} parent=39 // pred_check
        %p2132 = pneg %p106
      $region42: #{tpu_custom_call.1} parent=39 // pred_check_branch
        %2134 = sbr.rel (%p2132) target = $region44
      $region43: #{tpu_custom_call.1} parent=39 // pred_region
        %p2135 = scmp.lt.s32.totalorder %s15, 1
        %s2136 = scalar_select %p2135, %s15, 1
        %s2137 = smul.addr %s2136, 32
        %s2138 = smul.addr %s2137, 8
        %s2139 = scalar_lea.vmem %s3, %s2138
      $region44: #{tpu_custom_call.1} parent=39 // pred_fallthru
        _
    $region40: #{tpu_custom_call.1} parent=5 // pred_fallthru
      _
  $region6: #{tpu_custom_call.1} parent=0 // loop_footer
    %s13 = sadd.s32 1, %s9
  $region7: #{tpu_custom_call.1} parent=0 // loop_footer_branch
    %8 = sbr.rel target = $region3
  $region8: #{tpu_custom_call.1} parent=0 // loop_exit
    _

</llo_original>
